<compile_context>
chip_gen: v7x
topology: tpu7x:2x2x1
jax: 0.10.0
libtpu: 0.0.40
codegen_flags: <defaults>
</compile_context>

<pallas_src>
import jax
import jax.numpy as jnp
from jax import lax
from jax.experimental import pallas as pl
from jax.experimental.pallas import tpu as pltpu


def _round_up(x, m):
    return ((x + m - 1) // m) * m


def gru_encoder_kernel(i_ref,    # VMEM (Tc, 3Hp) f32 : precomputed input-path gates for chunk
                       h0_ref,   # VMEM (1, Hp)   f32 : initial hidden (used only at chunk 0)
                       wh_ref,   # VMEM (Hp, 3Hp)     : hidden-path weights [W_hr|W_hz|W_hn]^T
                       bh_ref,   # VMEM (1, 3Hp)  f32 : hidden-path bias (only n column nonzero)
                       out_ref,  # VMEM (Tc, Hp)  f32 : output rows for this chunk
                       h_scr):   # VMEM (1, Hp)   f32 : hidden carried across chunks
    Hp = h0_ref.shape[-1]
    Tc = i_ref.shape[0]

    @pl.when(pl.program_id(0) == 0)
    def _():
        h_scr[...] = h0_ref[...]

    wh = wh_ref[...]   # loaded once per chunk, stays resident for the fori_loop
    bh = bh_ref[...]

    def step(t, h):
        # Precomputed input path: [i_r + b_ir + b_hr | i_z + b_iz + b_hz | i_n + b_in]
        gi = i_ref[pl.ds(t, 1), :]                                   # (1, 3Hp)
        # Single per-step MXU dot: (1,Hp) x (Hp,3Hp); b_hn lives in bh's n column.
        gh = jnp.dot(h.astype(wh.dtype), wh,
                     preferred_element_type=jnp.float32) + bh        # (1, 3Hp)
        r = jax.nn.sigmoid(gi[:, :Hp] + gh[:, :Hp])                  # 128-aligned slices
        z = jax.nn.sigmoid(gi[:, Hp:2 * Hp] + gh[:, Hp:2 * Hp])
        n = jnp.tanh(gi[:, 2 * Hp:] + r * gh[:, 2 * Hp:])            # n = tanh(i_n + r*(h_n+b_hn))
        h_new = (1.0 - z) * n + z * h
        out_ref[pl.ds(t, 1), :] = h_new.astype(out_ref.dtype)        # row of the chunk block
        return h_new

    # h carried in registers across the chunk; spill to VMEM only at chunk end.
    h_final = lax.fori_loop(0, Tc, step, h_scr[...], unroll=True)
    h_scr[...] = h_final


def make_params(key, input_lang_size, hidden_size):
    """Deterministic synthetic parameters matching nn.Embedding + nn.GRU shapes."""
    k_emb, k_wih, k_whh, k_bih, k_bhh = jax.random.split(key, 5)
    H = hidden_size
    bound = 1.0 / jnp.sqrt(jnp.float32(H))
    return {
        # nn.Embedding default init: N(0, 1)
        "embedding": jax.random.normal(k_emb, (input_lang_size, H), jnp.float32),
        # nn.GRU default init: U(-1/sqrt(H), 1/sqrt(H)); gate order [r, z, n]
        "weight_ih": jax.random.uniform(k_wih, (3 * H, H), jnp.float32, -bound, bound),
        "weight_hh": jax.random.uniform(k_whh, (3 * H, H), jnp.float32, -bound, bound),
        "bias_ih": jax.random.uniform(k_bih, (3 * H,), jnp.float32, -bound, bound),
        "bias_hh": jax.random.uniform(k_bhh, (3 * H,), jnp.float32, -bound, bound),
    }


def prepare_params(params, weight_dtype=jnp.bfloat16):
    """One-time packing: transpose, pad to 128-lane gate blocks, fold biases.

    Layout: columns [0:Hp)=r gate, [Hp:2Hp)=z gate, [2Hp:3Hp)=n gate.
    Input-path bias b_i = [b_ir + b_hr | b_iz + b_hz | b_in] is folded into the
    hoisted projection; only b_hn stays per-step (inside r*(h@W_hn + b_hn)).
    Padded rows/cols are zero, so padded hidden lanes provably stay zero.
    """
    emb = params["embedding"]
    V, H = emb.shape
    Hp = _round_up(H, 128)

    wih_t = params["weight_ih"].T      # (H, 3H), columns ordered [r | z | n]
    whh_t = params["weight_hh"].T
    bih, bhh = params["bias_ih"], params["bias_hh"]

    def pack_w(wt):
        w = jnp.zeros((Hp, 3 * Hp), weight_dtype)
        for g in range(3):
            w = w.at[:H, g * Hp:g * Hp + H].set(
                wt[:, g * H:(g + 1) * H].astype(weight_dtype))
        return w

    w_i = pack_w(wih_t)                # used once per sequence in the hoisted projection
    w_h = pack_w(whh_t)                # the only weight resident in the recurrence kernel

    b_i = jnp.zeros((1, 3 * Hp), jnp.float32)
    b_i = b_i.at[0, 0:H].set(bih[:H] + bhh[:H])                       # r
    b_i = b_i.at[0, Hp:Hp + H].set(bih[H:2 * H] + bhh[H:2 * H])       # z
    b_i = b_i.at[0, 2 * Hp:2 * Hp + H].set(bih[2 * H:])               # n (input part)
    b_h = jnp.zeros((1, 3 * Hp), jnp.float32).at[0, 2 * Hp:2 * Hp + H].set(bhh[2 * H:])

    emb_p = jnp.zeros((V, Hp), jnp.float32).at[:, :H].set(emb)

    return {"H": H, "Hp": Hp, "emb": emb_p, "w_i": w_i, "w_h": w_h,
            "b_i": b_i, "b_h": b_h}


def encoder_forward(tokens, hidden, packed, chunk=8):
    """tokens: int32 (T,) (T=1 reproduces PyTorch Encoder.forward exactly).
    hidden: (1, 1, H) f32.  Returns (out (T,1,H), hidden_new (1,1,H))."""
    H, Hp = packed["H"], packed["Hp"]
    tok = jnp.asarray(tokens, jnp.int32).reshape(-1)
    T = tok.shape[0]
    Tc = int(chunk)                       # multiple of 8 -> lane/sublane-dense output block
    n_chunks = (T + Tc - 1) // Tc
    Tp = n_chunks * Tc

    # --- Hoisted input path (one batched matmul, real MXU M-rows) ------------
    x = packed["emb"][tok]                                            # (T, Hp) gather
    gi_all = jnp.dot(x.astype(packed["w_i"].dtype), packed["w_i"],
                     preferred_element_type=jnp.float32) + packed["b_i"]   # (T, 3Hp)
    gi_all = jnp.pad(gi_all, ((0, Tp - T), (0, 0)))                   # padded steps unread

    h0 = jnp.zeros((1, Hp), jnp.float32).at[:, :H].set(
        hidden.reshape(1, H).astype(jnp.float32))

    grid_spec = pltpu.PrefetchScalarGridSpec(
        num_scalar_prefetch=0,
        grid=(n_chunks,),
        in_specs=[
            pl.BlockSpec((Tc, 3 * Hp), lambda c: (c, 0)),      # input-path gates, per chunk
            pl.BlockSpec((1, Hp), lambda c: (0, 0)),           # initial hidden (resident)
            pl.BlockSpec((Hp, 3 * Hp), lambda c: (0, 0)),      # W_h (resident)
            pl.BlockSpec((1, 3 * Hp), lambda c: (0, 0)),       # b_h (resident)
        ],
        out_specs=pl.BlockSpec((Tc, Hp), lambda c: (c, 0)),
        scratch_shapes=[pltpu.VMEM((1, Hp), jnp.float32)],     # carried hidden state
    )

    out_p = pl.pallas_call(
        gru_encoder_kernel,
        out_shape=jax.ShapeDtypeStruct((Tp, Hp), jnp.float32),
        grid_spec=grid_spec,
        compiler_params=pltpu.CompilerParams(
            # the time-chunk axis carries the hidden-state dependency -> sequential
            dimension_semantics=("arbitrary",)),
    )(gi_all, h0, packed["w_h"], packed["b_h"])

    out = out_p[:T, :H].reshape(T, 1, H)
    hidden_new = out_p[T - 1, :H].reshape(1, 1, H)
    return out, hidden_new


def encoder_forward_ref(tokens, hidden, params):
    """Pure-JAX reference replicating torch.nn.GRU semantics step by step."""
    H = params["embedding"].shape[1]
    tok = jnp.asarray(tokens, jnp.int32).reshape(-1)
    h = hidden.reshape(1, H).astype(jnp.float32)
    outs = []
    for i in range(tok.shape[0]):
        x = params["embedding"][tok[i]].reshape(1, H)
        gi = x @ params["weight_ih"].T + params["bias_ih"]
        gh = h @ params["weight_hh"].T + params["bias_hh"]
        i_r, i_z, i_n = gi[:, :H], gi[:, H:2 * H], gi[:, 2 * H:]
        h_r, h_z, h_n = gh[:, :H], gh[:, H:2 * H], gh[:, 2 * H:]
        r = jax.nn.sigmoid(i_r + h_r)
        z = jax.nn.sigmoid(i_z + h_z)
        n = jnp.tanh(i_n + r * h_n)
        h = (1.0 - z) * n + z * h
        outs.append(h)
    out = jnp.stack(outs, axis=0)           # (T, 1, H)
    return out, h.reshape(1, 1, H)


if __name__ == "__main__":
    input_lang_size = 64
    hidden_size = 32
    seq_len = 8

    key = jax.random.PRNGKey(0)
    k_params, k_tok, k_tok2 = jax.random.split(key, 3)
    params = make_params(k_params, input_lang_size, hidden_size)

    tokens = jax.random.randint(k_tok, (seq_len,), 0, input_lang_size, jnp.int32)
    hidden0 = jnp.zeros((1, 1, hidden_size), jnp.float32)   # Encoder.init_hidden()
    out_ref, hid_ref = encoder_forward_ref(tokens, hidden0, params)

    # 1) f32 weight packing: tight-tolerance correctness check.
    packed_f32 = prepare_params(params, weight_dtype=jnp.float32)
    out32, hid32 = encoder_forward(tokens, hidden0, packed_f32)
    jax.block_until_ready((out32, hid32))
    assert out32.shape == (seq_len, 1, hidden_size)
    assert hid32.shape == (1, 1, hidden_size)
    assert jnp.allclose(out32, out_ref, atol=1e-4), "f32 output mismatch vs reference"
    assert jnp.allclose(hid32, hid_ref, atol=1e-4), "f32 hidden mismatch vs reference"

    # 2) bf16 weight packing (recommended deployment path): looser tolerance.
    packed_bf16 = prepare_params(params, weight_dtype=jnp.bfloat16)
    out16, hid16 = encoder_forward(tokens, hidden0, packed_bf16)
    jax.block_until_ready((out16, hid16))
    assert jnp.allclose(out16, out_ref, atol=2e-2), "bf16 output mismatch vs reference"
    assert jnp.allclose(hid16, hid_ref, atol=2e-2), "bf16 hidden mismatch vs reference"

    # 3) Non-multiple-of-chunk length: exercises hidden carry across chunks + padding.
    tokens_long = jax.random.randint(k_tok2, (13,), 0, input_lang_size, jnp.int32)
    out_ref_l, hid_ref_l = encoder_forward_ref(tokens_long, hidden0, params)
    out_l, hid_l = encoder_forward(tokens_long, hidden0, packed_f32, chunk=8)
    jax.block_until_ready((out_l, hid_l))
    assert jnp.allclose(out_l, out_ref_l, atol=1e-4), "multi-chunk output mismatch"
    assert jnp.allclose(hid_l, hid_ref_l, atol=1e-4), "multi-chunk hidden mismatch"

    # 4) T = 1 reproduces the original PyTorch Encoder.forward contract exactly.
    out1, hid1 = encoder_forward(tokens[:1], hidden0, packed_f32)
    jax.block_until_ready((out1, hid1))
    assert out1.shape == (1, 1, hidden_size) and hid1.shape == (1, 1, hidden_size)
    assert jnp.allclose(out1, out_ref[:1], atol=1e-4), "single-step mismatch"

    print("KERNEL_OK")
</pallas_src>

<mosaic_0001>
module attributes {stable_mosaic.version = 11 : i64} {
  func.func @gru_encoder_kernel(%arg0: i32, %arg1: memref<8x384xf32, #tpu.memory_space<vmem>>, %arg2: memref<1x128xf32, #tpu.memory_space<vmem>>, %arg3: memref<128x384xf32, #tpu.memory_space<vmem>>, %arg4: memref<1x384xf32, #tpu.memory_space<vmem>>, %arg5: memref<8x128xf32, #tpu.memory_space<vmem>>, %arg6: memref<1x128xf32, #tpu.memory_space<vmem>>) attributes {dimension_semantics = [#tpu.dimension_semantics<arbitrary>], iteration_bounds = array<i64: 1>, scalar_prefetch = 0 : i64, scratch_operands = 1 : i64, tpu.core_type = #tpu.core_type<tc>, window_params = [{transform_indices = @transform_0, window_bounds = array<i64: 8, 384>}, {pipeline_mode = #tpu.pipeline_mode<synchronous>, transform_indices = @transform_1, window_bounds = array<i64: 1, 128>}, {pipeline_mode = #tpu.pipeline_mode<synchronous>, transform_indices = @transform_2, window_bounds = array<i64: 128, 384>}, {pipeline_mode = #tpu.pipeline_mode<synchronous>, transform_indices = @transform_3, window_bounds = array<i64: 1, 384>}, {transform_indices = @transform_4, window_bounds = array<i64: 8, 128>}]} {
    %c0_i32 = arith.constant 0 : i32
    %0 = arith.cmpi eq, %arg0, %c0_i32 : i32
    %1 = arith.extui %0 : i1 to i32
    %c0_i32_0 = arith.constant 0 : i32
    %2 = arith.cmpi ne, %1, %c0_i32_0 : i32
    scf.if %2 {
      %c0_56 = arith.constant 0 : index
      %c0_57 = arith.constant 0 : index
      %263 = vector.load %arg2[%c0_56, %c0_57] : memref<1x128xf32, #tpu.memory_space<vmem>>, vector<1x128xf32>
      %c0_58 = arith.constant 0 : index
      %c0_59 = arith.constant 0 : index
      %264 = vector.load %arg6[%c0_58, %c0_59] : memref<1x128xf32, #tpu.memory_space<vmem>>, vector<1x128xf32>
      tpu.vector_store %arg6[%c0_58, %c0_59], %263 {strides = array<i32>} : memref<1x128xf32, #tpu.memory_space<vmem>>, vector<1x128xf32>,
    } else {
    }
    %c0 = arith.constant 0 : index
    %c0_1 = arith.constant 0 : index
    %3 = vector.load %arg3[%c0, %c0_1] : memref<128x384xf32, #tpu.memory_space<vmem>>, vector<128x384xf32>
    %c0_2 = arith.constant 0 : index
    %c0_3 = arith.constant 0 : index
    %4 = vector.load %arg4[%c0_2, %c0_3] : memref<1x384xf32, #tpu.memory_space<vmem>>, vector<1x384xf32>
    %c0_4 = arith.constant 0 : index
    %c0_5 = arith.constant 0 : index
    %5 = vector.load %arg6[%c0_4, %c0_5] : memref<1x128xf32, #tpu.memory_space<vmem>>, vector<1x128xf32>
    %c0_i32_6 = arith.constant 0 : i32
    %6 = arith.index_cast %c0_i32_6 : i32 to index
    %c0_7 = arith.constant 0 : index
    %7 = vector.load %arg1[%6, %c0_7] : memref<8x384xf32, #tpu.memory_space<vmem>>, vector<1x384xf32>
    %cst = arith.constant dense<0.000000e+00> : vector<1x384xf32>
    %8 = tpu.matmul %5, %3, %cst {dimension_numbers = #tpu.dot_dimension_numbers<[1], [0], [0], [1], [0, 0, 1, 1], [], []>} : vector<1x128xf32>, vector<128x384xf32>, vector<1x384xf32> -> vector<1x384xf32>
    %9 = arith.addf %8, %4 : vector<1x384xf32>
    %10 = vector.extract_strided_slice %7 {offsets = [0, 0], sizes = [1, 128], strides = [1, 1]} : vector<1x384xf32> to vector<1x128xf32>
    %11 = vector.extract_strided_slice %9 {offsets = [0, 0], sizes = [1, 128], strides = [1, 1]} : vector<1x384xf32> to vector<1x128xf32>
    %12 = arith.addf %10, %11 : vector<1x128xf32>
    %13 = arith.negf %12 : vector<1x128xf32>
    %14 = math.exp %13 : vector<1x128xf32>
    %cst_8 = arith.constant 1.000000e+00 : f32
    %15 = vector.broadcast %cst_8 : f32 to vector<1x128xf32>
    %16 = arith.addf %15, %14 : vector<1x128xf32>
    %17 = arith.divf %15, %16 : vector<1x128xf32>
    %18 = vector.extract_strided_slice %7 {offsets = [0, 128], sizes = [1, 128], strides = [1, 1]} : vector<1x384xf32> to vector<1x128xf32>
    %19 = vector.extract_strided_slice %9 {offsets = [0, 128], sizes = [1, 128], strides = [1, 1]} : vector<1x384xf32> to vector<1x128xf32>
    %20 = arith.addf %18, %19 : vector<1x128xf32>
    %21 = arith.negf %20 : vector<1x128xf32>
    %22 = math.exp %21 : vector<1x128xf32>
    %cst_9 = arith.constant 1.000000e+00 : f32
    %23 = vector.broadcast %cst_9 : f32 to vector<1x128xf32>
    %24 = arith.addf %23, %22 : vector<1x128xf32>
    %25 = arith.divf %23, %24 : vector<1x128xf32>
    %26 = vector.extract_strided_slice %7 {offsets = [0, 256], sizes = [1, 128], strides = [1, 1]} : vector<1x384xf32> to vector<1x128xf32>
    %27 = vector.extract_strided_slice %9 {offsets = [0, 256], sizes = [1, 128], strides = [1, 1]} : vector<1x384xf32> to vector<1x128xf32>
    %28 = arith.mulf %17, %27 : vector<1x128xf32>
    %29 = arith.addf %26, %28 : vector<1x128xf32>
    %30 = math.tanh %29 : vector<1x128xf32>
    %cst_10 = arith.constant 1.000000e+00 : f32
    %31 = vector.broadcast %cst_10 : f32 to vector<1x128xf32>
    %32 = arith.subf %31, %25 : vector<1x128xf32>
    %33 = arith.mulf %32, %30 : vector<1x128xf32>
    %34 = arith.mulf %25, %5 : vector<1x128xf32>
    %35 = arith.addf %33, %34 : vector<1x128xf32>
    %36 = arith.index_cast %c0_i32_6 : i32 to index
    %c0_11 = arith.constant 0 : index
    %37 = vector.load %arg5[%36, %c0_11] : memref<8x128xf32, #tpu.memory_space<vmem>>, vector<1x128xf32>
    tpu.vector_store %arg5[%36, %c0_11], %35 {strides = array<i32>} : memref<8x128xf32, #tpu.memory_space<vmem>>, vector<1x128xf32>,
    %c1_i32 = arith.constant 1 : i32
    %38 = arith.index_cast %c1_i32 : i32 to index
    %c0_12 = arith.constant 0 : index
    %39 = vector.load %arg1[%38, %c0_12] : memref<8x384xf32, #tpu.memory_space<vmem>>, vector<1x384xf32>
    %cst_13 = arith.constant dense<0.000000e+00> : vector<1x384xf32>
    %40 = tpu.matmul %35, %3, %cst_13 {dimension_numbers = #tpu.dot_dimension_numbers<[1], [0], [0], [1], [0, 0, 1, 1], [], []>} : vector<1x128xf32>, vector<128x384xf32>, vector<1x384xf32> -> vector<1x384xf32>
    %41 = arith.addf %40, %4 : vector<1x384xf32>
    %42 = vector.extract_strided_slice %39 {offsets = [0, 0], sizes = [1, 128], strides = [1, 1]} : vector<1x384xf32> to vector<1x128xf32>
    %43 = vector.extract_strided_slice %41 {offsets = [0, 0], sizes = [1, 128], strides = [1, 1]} : vector<1x384xf32> to vector<1x128xf32>
    %44 = arith.addf %42, %43 : vector<1x128xf32>
    %45 = arith.negf %44 : vector<1x128xf32>
    %46 = math.exp %45 : vector<1x128xf32>
    %cst_14 = arith.constant 1.000000e+00 : f32
    %47 = vector.broadcast %cst_14 : f32 to vector<1x128xf32>
    %48 = arith.addf %47, %46 : vector<1x128xf32>
    %49 = arith.divf %47, %48 : vector<1x128xf32>
    %50 = vector.extract_strided_slice %39 {offsets = [0, 128], sizes = [1, 128], strides = [1, 1]} : vector<1x384xf32> to vector<1x128xf32>
    %51 = vector.extract_strided_slice %41 {offsets = [0, 128], sizes = [1, 128], strides = [1, 1]} : vector<1x384xf32> to vector<1x128xf32>
    %52 = arith.addf %50, %51 : vector<1x128xf32>
    %53 = arith.negf %52 : vector<1x128xf32>
    %54 = math.exp %53 : vector<1x128xf32>
    %cst_15 = arith.constant 1.000000e+00 : f32
    %55 = vector.broadcast %cst_15 : f32 to vector<1x128xf32>
    %56 = arith.addf %55, %54 : vector<1x128xf32>
    %57 = arith.divf %55, %56 : vector<1x128xf32>
    %58 = vector.extract_strided_slice %39 {offsets = [0, 256], sizes = [1, 128], strides = [1, 1]} : vector<1x384xf32> to vector<1x128xf32>
    %59 = vector.extract_strided_slice %41 {offsets = [0, 256], sizes = [1, 128], strides = [1, 1]} : vector<1x384xf32> to vector<1x128xf32>
    %60 = arith.mulf %49, %59 : vector<1x128xf32>
    %61 = arith.addf %58, %60 : vector<1x128xf32>
    %62 = math.tanh %61 : vector<1x128xf32>
    %cst_16 = arith.constant 1.000000e+00 : f32
    %63 = vector.broadcast %cst_16 : f32 to vector<1x128xf32>
    %64 = arith.subf %63, %57 : vector<1x128xf32>
    %65 = arith.mulf %64, %62 : vector<1x128xf32>
    %66 = arith.mulf %57, %35 : vector<1x128xf32>
    %67 = arith.addf %65, %66 : vector<1x128xf32>
    %68 = arith.index_cast %c1_i32 : i32 to index
    %c0_17 = arith.constant 0 : index
    %69 = vector.load %arg5[%68, %c0_17] : memref<8x128xf32, #tpu.memory_space<vmem>>, vector<1x128xf32>
    tpu.vector_store %arg5[%68, %c0_17], %67 {strides = array<i32>} : memref<8x128xf32, #tpu.memory_space<vmem>>, vector<1x128xf32>,
    %c2_i32 = arith.constant 2 : i32
    %70 = arith.index_cast %c2_i32 : i32 to index
    %c0_18 = arith.constant 0 : index
    %71 = vector.load %arg1[%70, %c0_18] : memref<8x384xf32, #tpu.memory_space<vmem>>, vector<1x384xf32>
    %cst_19 = arith.constant dense<0.000000e+00> : vector<1x384xf32>
    %72 = tpu.matmul %67, %3, %cst_19 {dimension_numbers = #tpu.dot_dimension_numbers<[1], [0], [0], [1], [0, 0, 1, 1], [], []>} : vector<1x128xf32>, vector<128x384xf32>, vector<1x384xf32> -> vector<1x384xf32>
    %73 = arith.addf %72, %4 : vector<1x384xf32>
    %74 = vector.extract_strided_slice %71 {offsets = [0, 0], sizes = [1, 128], strides = [1, 1]} : vector<1x384xf32> to vector<1x128xf32>
    %75 = vector.extract_strided_slice %73 {offsets = [0, 0], sizes = [1, 128], strides = [1, 1]} : vector<1x384xf32> to vector<1x128xf32>
    %76 = arith.addf %74, %75 : vector<1x128xf32>
    %77 = arith.negf %76 : vector<1x128xf32>
    %78 = math.exp %77 : vector<1x128xf32>
    %cst_20 = arith.constant 1.000000e+00 : f32
    %79 = vector.broadcast %cst_20 : f32 to vector<1x128xf32>
    %80 = arith.addf %79, %78 : vector<1x128xf32>
    %81 = arith.divf %79, %80 : vector<1x128xf32>
    %82 = vector.extract_strided_slice %71 {offsets = [0, 128], sizes = [1, 128], strides = [1, 1]} : vector<1x384xf32> to vector<1x128xf32>
    %83 = vector.extract_strided_slice %73 {offsets = [0, 128], sizes = [1, 128], strides = [1, 1]} : vector<1x384xf32> to vector<1x128xf32>
    %84 = arith.addf %82, %83 : vector<1x128xf32>
    %85 = arith.negf %84 : vector<1x128xf32>
    %86 = math.exp %85 : vector<1x128xf32>
    %cst_21 = arith.constant 1.000000e+00 : f32
    %87 = vector.broadcast %cst_21 : f32 to vector<1x128xf32>
    %88 = arith.addf %87, %86 : vector<1x128xf32>
    %89 = arith.divf %87, %88 : vector<1x128xf32>
    %90 = vector.extract_strided_slice %71 {offsets = [0, 256], sizes = [1, 128], strides = [1, 1]} : vector<1x384xf32> to vector<1x128xf32>
    %91 = vector.extract_strided_slice %73 {offsets = [0, 256], sizes = [1, 128], strides = [1, 1]} : vector<1x384xf32> to vector<1x128xf32>
    %92 = arith.mulf %81, %91 : vector<1x128xf32>
    %93 = arith.addf %90, %92 : vector<1x128xf32>
    %94 = math.tanh %93 : vector<1x128xf32>
    %cst_22 = arith.constant 1.000000e+00 : f32
    %95 = vector.broadcast %cst_22 : f32 to vector<1x128xf32>
    %96 = arith.subf %95, %89 : vector<1x128xf32>
    %97 = arith.mulf %96, %94 : vector<1x128xf32>
    %98 = arith.mulf %89, %67 : vector<1x128xf32>
    %99 = arith.addf %97, %98 : vector<1x128xf32>
    %100 = arith.index_cast %c2_i32 : i32 to index
    %c0_23 = arith.constant 0 : index
    %101 = vector.load %arg5[%100, %c0_23] : memref<8x128xf32, #tpu.memory_space<vmem>>, vector<1x128xf32>
    tpu.vector_store %arg5[%100, %c0_23], %99 {strides = array<i32>} : memref<8x128xf32, #tpu.memory_space<vmem>>, vector<1x128xf32>,
    %c3_i32 = arith.constant 3 : i32
    %102 = arith.index_cast %c3_i32 : i32 to index
    %c0_24 = arith.constant 0 : index
    %103 = vector.load %arg1[%102, %c0_24] : memref<8x384xf32, #tpu.memory_space<vmem>>, vector<1x384xf32>
    %cst_25 = arith.constant dense<0.000000e+00> : vector<1x384xf32>
    %104 = tpu.matmul %99, %3, %cst_25 {dimension_numbers = #tpu.dot_dimension_numbers<[1], [0], [0], [1], [0, 0, 1, 1], [], []>} : vector<1x128xf32>, vector<128x384xf32>, vector<1x384xf32> -> vector<1x384xf32>
    %105 = arith.addf %104, %4 : vector<1x384xf32>
    %106 = vector.extract_strided_slice %103 {offsets = [0, 0], sizes = [1, 128], strides = [1, 1]} : vector<1x384xf32> to vector<1x128xf32>
    %107 = vector.extract_strided_slice %105 {offsets = [0, 0], sizes = [1, 128], strides = [1, 1]} : vector<1x384xf32> to vector<1x128xf32>
    %108 = arith.addf %106, %107 : vector<1x128xf32>
    %109 = arith.negf %108 : vector<1x128xf32>
    %110 = math.exp %109 : vector<1x128xf32>
    %cst_26 = arith.constant 1.000000e+00 : f32
    %111 = vector.broadcast %cst_26 : f32 to vector<1x128xf32>
    %112 = arith.addf %111, %110 : vector<1x128xf32>
    %113 = arith.divf %111, %112 : vector<1x128xf32>
    %114 = vector.extract_strided_slice %103 {offsets = [0, 128], sizes = [1, 128], strides = [1, 1]} : vector<1x384xf32> to vector<1x128xf32>
    %115 = vector.extract_strided_slice %105 {offsets = [0, 128], sizes = [1, 128], strides = [1, 1]} : vector<1x384xf32> to vector<1x128xf32>
    %116 = arith.addf %114, %115 : vector<1x128xf32>
    %117 = arith.negf %116 : vector<1x128xf32>
    %118 = math.exp %117 : vector<1x128xf32>
    %cst_27 = arith.constant 1.000000e+00 : f32
    %119 = vector.broadcast %cst_27 : f32 to vector<1x128xf32>
    %120 = arith.addf %119, %118 : vector<1x128xf32>
    %121 = arith.divf %119, %120 : vector<1x128xf32>
    %122 = vector.extract_strided_slice %103 {offsets = [0, 256], sizes = [1, 128], strides = [1, 1]} : vector<1x384xf32> to vector<1x128xf32>
    %123 = vector.extract_strided_slice %105 {offsets = [0, 256], sizes = [1, 128], strides = [1, 1]} : vector<1x384xf32> to vector<1x128xf32>
    %124 = arith.mulf %113, %123 : vector<1x128xf32>
    %125 = arith.addf %122, %124 : vector<1x128xf32>
    %126 = math.tanh %125 : vector<1x128xf32>
    %cst_28 = arith.constant 1.000000e+00 : f32
    %127 = vector.broadcast %cst_28 : f32 to vector<1x128xf32>
    %128 = arith.subf %127, %121 : vector<1x128xf32>
    %129 = arith.mulf %128, %126 : vector<1x128xf32>
    %130 = arith.mulf %121, %99 : vector<1x128xf32>
    %131 = arith.addf %129, %130 : vector<1x128xf32>
    %132 = arith.index_cast %c3_i32 : i32 to index
    %c0_29 = arith.constant 0 : index
    %133 = vector.load %arg5[%132, %c0_29] : memref<8x128xf32, #tpu.memory_space<vmem>>, vector<1x128xf32>
    tpu.vector_store %arg5[%132, %c0_29], %131 {strides = array<i32>} : memref<8x128xf32, #tpu.memory_space<vmem>>, vector<1x128xf32>,
    %c4_i32 = arith.constant 4 : i32
    %134 = arith.index_cast %c4_i32 : i32 to index
    %c0_30 = arith.constant 0 : index
    %135 = vector.load %arg1[%134, %c0_30] : memref<8x384xf32, #tpu.memory_space<vmem>>, vector<1x384xf32>
    %cst_31 = arith.constant dense<0.000000e+00> : vector<1x384xf32>
    %136 = tpu.matmul %131, %3, %cst_31 {dimension_numbers = #tpu.dot_dimension_numbers<[1], [0], [0], [1], [0, 0, 1, 1], [], []>} : vector<1x128xf32>, vector<128x384xf32>, vector<1x384xf32> -> vector<1x384xf32>
    %137 = arith.addf %136, %4 : vector<1x384xf32>
    %138 = vector.extract_strided_slice %135 {offsets = [0, 0], sizes = [1, 128], strides = [1, 1]} : vector<1x384xf32> to vector<1x128xf32>
    %139 = vector.extract_strided_slice %137 {offsets = [0, 0], sizes = [1, 128], strides = [1, 1]} : vector<1x384xf32> to vector<1x128xf32>
    %140 = arith.addf %138, %139 : vector<1x128xf32>
    %141 = arith.negf %140 : vector<1x128xf32>
    %142 = math.exp %141 : vector<1x128xf32>
    %cst_32 = arith.constant 1.000000e+00 : f32
    %143 = vector.broadcast %cst_32 : f32 to vector<1x128xf32>
    %144 = arith.addf %143, %142 : vector<1x128xf32>
    %145 = arith.divf %143, %144 : vector<1x128xf32>
    %146 = vector.extract_strided_slice %135 {offsets = [0, 128], sizes = [1, 128], strides = [1, 1]} : vector<1x384xf32> to vector<1x128xf32>
    %147 = vector.extract_strided_slice %137 {offsets = [0, 128], sizes = [1, 128], strides = [1, 1]} : vector<1x384xf32> to vector<1x128xf32>
    %148 = arith.addf %146, %147 : vector<1x128xf32>
    %149 = arith.negf %148 : vector<1x128xf32>
    %150 = math.exp %149 : vector<1x128xf32>
    %cst_33 = arith.constant 1.000000e+00 : f32
    %151 = vector.broadcast %cst_33 : f32 to vector<1x128xf32>
    %152 = arith.addf %151, %150 : vector<1x128xf32>
    %153 = arith.divf %151, %152 : vector<1x128xf32>
    %154 = vector.extract_strided_slice %135 {offsets = [0, 256], sizes = [1, 128], strides = [1, 1]} : vector<1x384xf32> to vector<1x128xf32>
    %155 = vector.extract_strided_slice %137 {offsets = [0, 256], sizes = [1, 128], strides = [1, 1]} : vector<1x384xf32> to vector<1x128xf32>
    %156 = arith.mulf %145, %155 : vector<1x128xf32>
    %157 = arith.addf %154, %156 : vector<1x128xf32>
    %158 = math.tanh %157 : vector<1x128xf32>
    %cst_34 = arith.constant 1.000000e+00 : f32
    %159 = vector.broadcast %cst_34 : f32 to vector<1x128xf32>
    %160 = arith.subf %159, %153 : vector<1x128xf32>
    %161 = arith.mulf %160, %158 : vector<1x128xf32>
    %162 = arith.mulf %153, %131 : vector<1x128xf32>
    %163 = arith.addf %161, %162 : vector<1x128xf32>
    %164 = arith.index_cast %c4_i32 : i32 to index
    %c0_35 = arith.constant 0 : index
    %165 = vector.load %arg5[%164, %c0_35] : memref<8x128xf32, #tpu.memory_space<vmem>>, vector<1x128xf32>
    tpu.vector_store %arg5[%164, %c0_35], %163 {strides = array<i32>} : memref<8x128xf32, #tpu.memory_space<vmem>>, vector<1x128xf32>,
    %c5_i32 = arith.constant 5 : i32
    %166 = arith.index_cast %c5_i32 : i32 to index
    %c0_36 = arith.constant 0 : index
    %167 = vector.load %arg1[%166, %c0_36] : memref<8x384xf32, #tpu.memory_space<vmem>>, vector<1x384xf32>
    %cst_37 = arith.constant dense<0.000000e+00> : vector<1x384xf32>
    %168 = tpu.matmul %163, %3, %cst_37 {dimension_numbers = #tpu.dot_dimension_numbers<[1], [0], [0], [1], [0, 0, 1, 1], [], []>} : vector<1x128xf32>, vector<128x384xf32>, vector<1x384xf32> -> vector<1x384xf32>
    %169 = arith.addf %168, %4 : vector<1x384xf32>
    %170 = vector.extract_strided_slice %167 {offsets = [0, 0], sizes = [1, 128], strides = [1, 1]} : vector<1x384xf32> to vector<1x128xf32>
    %171 = vector.extract_strided_slice %169 {offsets = [0, 0], sizes = [1, 128], strides = [1, 1]} : vector<1x384xf32> to vector<1x128xf32>
    %172 = arith.addf %170, %171 : vector<1x128xf32>
    %173 = arith.negf %172 : vector<1x128xf32>
    %174 = math.exp %173 : vector<1x128xf32>
    %cst_38 = arith.constant 1.000000e+00 : f32
    %175 = vector.broadcast %cst_38 : f32 to vector<1x128xf32>
    %176 = arith.addf %175, %174 : vector<1x128xf32>
    %177 = arith.divf %175, %176 : vector<1x128xf32>
    %178 = vector.extract_strided_slice %167 {offsets = [0, 128], sizes = [1, 128], strides = [1, 1]} : vector<1x384xf32> to vector<1x128xf32>
    %179 = vector.extract_strided_slice %169 {offsets = [0, 128], sizes = [1, 128], strides = [1, 1]} : vector<1x384xf32> to vector<1x128xf32>
    %180 = arith.addf %178, %179 : vector<1x128xf32>
    %181 = arith.negf %180 : vector<1x128xf32>
    %182 = math.exp %181 : vector<1x128xf32>
    %cst_39 = arith.constant 1.000000e+00 : f32
    %183 = vector.broadcast %cst_39 : f32 to vector<1x128xf32>
    %184 = arith.addf %183, %182 : vector<1x128xf32>
    %185 = arith.divf %183, %184 : vector<1x128xf32>
    %186 = vector.extract_strided_slice %167 {offsets = [0, 256], sizes = [1, 128], strides = [1, 1]} : vector<1x384xf32> to vector<1x128xf32>
    %187 = vector.extract_strided_slice %169 {offsets = [0, 256], sizes = [1, 128], strides = [1, 1]} : vector<1x384xf32> to vector<1x128xf32>
    %188 = arith.mulf %177, %187 : vector<1x128xf32>
    %189 = arith.addf %186, %188 : vector<1x128xf32>
    %190 = math.tanh %189 : vector<1x128xf32>
    %cst_40 = arith.constant 1.000000e+00 : f32
    %191 = vector.broadcast %cst_40 : f32 to vector<1x128xf32>
    %192 = arith.subf %191, %185 : vector<1x128xf32>
    %193 = arith.mulf %192, %190 : vector<1x128xf32>
    %194 = arith.mulf %185, %163 : vector<1x128xf32>
    %195 = arith.addf %193, %194 : vector<1x128xf32>
    %196 = arith.index_cast %c5_i32 : i32 to index
    %c0_41 = arith.constant 0 : index
    %197 = vector.load %arg5[%196, %c0_41] : memref<8x128xf32, #tpu.memory_space<vmem>>, vector<1x128xf32>
    tpu.vector_store %arg5[%196, %c0_41], %195 {strides = array<i32>} : memref<8x128xf32, #tpu.memory_space<vmem>>, vector<1x128xf32>,
    %c6_i32 = arith.constant 6 : i32
    %198 = arith.index_cast %c6_i32 : i32 to index
    %c0_42 = arith.constant 0 : index
    %199 = vector.load %arg1[%198, %c0_42] : memref<8x384xf32, #tpu.memory_space<vmem>>, vector<1x384xf32>
    %cst_43 = arith.constant dense<0.000000e+00> : vector<1x384xf32>
    %200 = tpu.matmul %195, %3, %cst_43 {dimension_numbers = #tpu.dot_dimension_numbers<[1], [0], [0], [1], [0, 0, 1, 1], [], []>} : vector<1x128xf32>, vector<128x384xf32>, vector<1x384xf32> -> vector<1x384xf32>
    %201 = arith.addf %200, %4 : vector<1x384xf32>
    %202 = vector.extract_strided_slice %199 {offsets = [0, 0], sizes = [1, 128], strides = [1, 1]} : vector<1x384xf32> to vector<1x128xf32>
    %203 = vector.extract_strided_slice %201 {offsets = [0, 0], sizes = [1, 128], strides = [1, 1]} : vector<1x384xf32> to vector<1x128xf32>
    %204 = arith.addf %202, %203 : vector<1x128xf32>
    %205 = arith.negf %204 : vector<1x128xf32>
    %206 = math.exp %205 : vector<1x128xf32>
    %cst_44 = arith.constant 1.000000e+00 : f32
    %207 = vector.broadcast %cst_44 : f32 to vector<1x128xf32>
    %208 = arith.addf %207, %206 : vector<1x128xf32>
    %209 = arith.divf %207, %208 : vector<1x128xf32>
    %210 = vector.extract_strided_slice %199 {offsets = [0, 128], sizes = [1, 128], strides = [1, 1]} : vector<1x384xf32> to vector<1x128xf32>
    %211 = vector.extract_strided_slice %201 {offsets = [0, 128], sizes = [1, 128], strides = [1, 1]} : vector<1x384xf32> to vector<1x128xf32>
    %212 = arith.addf %210, %211 : vector<1x128xf32>
    %213 = arith.negf %212 : vector<1x128xf32>
    %214 = math.exp %213 : vector<1x128xf32>
    %cst_45 = arith.constant 1.000000e+00 : f32
    %215 = vector.broadcast %cst_45 : f32 to vector<1x128xf32>
    %216 = arith.addf %215, %214 : vector<1x128xf32>
    %217 = arith.divf %215, %216 : vector<1x128xf32>
    %218 = vector.extract_strided_slice %199 {offsets = [0, 256], sizes = [1, 128], strides = [1, 1]} : vector<1x384xf32> to vector<1x128xf32>
    %219 = vector.extract_strided_slice %201 {offsets = [0, 256], sizes = [1, 128], strides = [1, 1]} : vector<1x384xf32> to vector<1x128xf32>
    %220 = arith.mulf %209, %219 : vector<1x128xf32>
    %221 = arith.addf %218, %220 : vector<1x128xf32>
    %222 = math.tanh %221 : vector<1x128xf32>
    %cst_46 = arith.constant 1.000000e+00 : f32
    %223 = vector.broadcast %cst_46 : f32 to vector<1x128xf32>
    %224 = arith.subf %223, %217 : vector<1x128xf32>
    %225 = arith.mulf %224, %222 : vector<1x128xf32>
    %226 = arith.mulf %217, %195 : vector<1x128xf32>
    %227 = arith.addf %225, %226 : vector<1x128xf32>
    %228 = arith.index_cast %c6_i32 : i32 to index
    %c0_47 = arith.constant 0 : index
    %229 = vector.load %arg5[%228, %c0_47] : memref<8x128xf32, #tpu.memory_space<vmem>>, vector<1x128xf32>
    tpu.vector_store %arg5[%228, %c0_47], %227 {strides = array<i32>} : memref<8x128xf32, #tpu.memory_space<vmem>>, vector<1x128xf32>,
    %c7_i32 = arith.constant 7 : i32
    %230 = arith.index_cast %c7_i32 : i32 to index
    %c0_48 = arith.constant 0 : index
    %231 = vector.load %arg1[%230, %c0_48] : memref<8x384xf32, #tpu.memory_space<vmem>>, vector<1x384xf32>
    %cst_49 = arith.constant dense<0.000000e+00> : vector<1x384xf32>
    %232 = tpu.matmul %227, %3, %cst_49 {dimension_numbers = #tpu.dot_dimension_numbers<[1], [0], [0], [1], [0, 0, 1, 1], [], []>} : vector<1x128xf32>, vector<128x384xf32>, vector<1x384xf32> -> vector<1x384xf32>
    %233 = arith.addf %232, %4 : vector<1x384xf32>
    %234 = vector.extract_strided_slice %231 {offsets = [0, 0], sizes = [1, 128], strides = [1, 1]} : vector<1x384xf32> to vector<1x128xf32>
    %235 = vector.extract_strided_slice %233 {offsets = [0, 0], sizes = [1, 128], strides = [1, 1]} : vector<1x384xf32> to vector<1x128xf32>
    %236 = arith.addf %234, %235 : vector<1x128xf32>
    %237 = arith.negf %236 : vector<1x128xf32>
    %238 = math.exp %237 : vector<1x128xf32>
    %cst_50 = arith.constant 1.000000e+00 : f32
    %239 = vector.broadcast %cst_50 : f32 to vector<1x128xf32>
    %240 = arith.addf %239, %238 : vector<1x128xf32>
    %241 = arith.divf %239, %240 : vector<1x128xf32>
    %242 = vector.extract_strided_slice %231 {offsets = [0, 128], sizes = [1, 128], strides = [1, 1]} : vector<1x384xf32> to vector<1x128xf32>
    %243 = vector.extract_strided_slice %233 {offsets = [0, 128], sizes = [1, 128], strides = [1, 1]} : vector<1x384xf32> to vector<1x128xf32>
    %244 = arith.addf %242, %243 : vector<1x128xf32>
    %245 = arith.negf %244 : vector<1x128xf32>
    %246 = math.exp %245 : vector<1x128xf32>
    %cst_51 = arith.constant 1.000000e+00 : f32
    %247 = vector.broadcast %cst_51 : f32 to vector<1x128xf32>
    %248 = arith.addf %247, %246 : vector<1x128xf32>
    %249 = arith.divf %247, %248 : vector<1x128xf32>
    %250 = vector.extract_strided_slice %231 {offsets = [0, 256], sizes = [1, 128], strides = [1, 1]} : vector<1x384xf32> to vector<1x128xf32>
    %251 = vector.extract_strided_slice %233 {offsets = [0, 256], sizes = [1, 128], strides = [1, 1]} : vector<1x384xf32> to vector<1x128xf32>
    %252 = arith.mulf %241, %251 : vector<1x128xf32>
    %253 = arith.addf %250, %252 : vector<1x128xf32>
    %254 = math.tanh %253 : vector<1x128xf32>
    %cst_52 = arith.constant 1.000000e+00 : f32
    %255 = vector.broadcast %cst_52 : f32 to vector<1x128xf32>
    %256 = arith.subf %255, %249 : vector<1x128xf32>
    %257 = arith.mulf %256, %254 : vector<1x128xf32>
    %258 = arith.mulf %249, %227 : vector<1x128xf32>
    %259 = arith.addf %257, %258 : vector<1x128xf32>
    %260 = arith.index_cast %c7_i32 : i32 to index
    %c0_53 = arith.constant 0 : index
    %261 = vector.load %arg5[%260, %c0_53] : memref<8x128xf32, #tpu.memory_space<vmem>>, vector<1x128xf32>
    tpu.vector_store %arg5[%260, %c0_53], %259 {strides = array<i32>} : memref<8x128xf32, #tpu.memory_space<vmem>>, vector<1x128xf32>,
    %c8_i32 = arith.constant 8 : i32
    %c0_54 = arith.constant 0 : index
    %c0_55 = arith.constant 0 : index
    %262 = vector.load %arg6[%c0_54, %c0_55] : memref<1x128xf32, #tpu.memory_space<vmem>>, vector<1x128xf32>
    tpu.vector_store %arg6[%c0_54, %c0_55], %259 {strides = array<i32>} : memref<1x128xf32, #tpu.memory_space<vmem>>, vector<1x128xf32>,
    return
  }
  func.func @transform_0(%arg0: i32) -> (i32, i32) {
    %c0_i32 = arith.constant 0 : i32
    %c0_i32_0 = arith.constant 0 : i32
    return %arg0, %c0_i32 : i32, i32
  }
  func.func @transform_1(%arg0: i32) -> (i32, i32) {
    %c0_i32 = arith.constant 0 : i32
    %c0_i32_0 = arith.constant 0 : i32
    %c0_i32_1 = arith.constant 0 : i32
    return %c0_i32, %c0_i32_0 : i32, i32
  }
  func.func @transform_2(%arg0: i32) -> (i32, i32) {
    %c0_i32 = arith.constant 0 : i32
    %c0_i32_0 = arith.constant 0 : i32
    %c0_i32_1 = arith.constant 0 : i32
    return %c0_i32, %c0_i32_0 : i32, i32
  }
  func.func @transform_3(%arg0: i32) -> (i32, i32) {
    %c0_i32 = arith.constant 0 : i32
    %c0_i32_0 = arith.constant 0 : i32
    %c0_i32_1 = arith.constant 0 : i32
    return %c0_i32, %c0_i32_0 : i32, i32
  }
  func.func @transform_4(%arg0: i32) -> (i32, i32) {
    %c0_i32 = arith.constant 0 : i32
    %c0_i32_0 = arith.constant 0 : i32
    return %arg0, %c0_i32 : i32, i32
  }
}

</mosaic_0001>

<llo_original>
// kernel: tpu_custom_call.1
$region0: #{tpu_custom_call.1}
  #allocation0 [shape = 'u32[]', space=smem, size = 0x4, offset = 0x4, fixed_abs, tag = 'smem constant byte address 0x4 - core index']
  #allocation1 [shape = 'u32[144,128]{1,0:T(1,128)}', space=vmem, size = 0x12000, scoped, tag = 'internal scratch']
  #allocation2 [shape = 'f32[1,128]{1,0:T(1,128)}', space=vmem, size = 0x200, scoped, tag = 'scratch operand']
  %s0 = inlined_call_operand.hbm [shape: f32[8,384], index: 0, kind: input, shape index: {}]
  %s1 = inlined_call_operand.vmem [shape: f32[1,128], index: 1, kind: input, shape index: {}]
  %s2 = inlined_call_operand.hbm [shape: f32[128,384], index: 2, kind: input, shape index: {}]
  %s3 = inlined_call_operand.vmem [shape: f32[1,384], index: 3, kind: input, shape index: {}]
  %s4 = inlined_call_operand.hbm [shape: f32[8,128], index: 4, kind: output, shape index: {}]
  %s5 = sld [smem:[#allocation0]]
  $region38: #{tpu_custom_call.1} parent=0
    _
  %s7 = ssub.s32 1, %s5
  %s8 = scalar_select 0, %s7, %s5
  $region1: #{tpu_custom_call.1} parent=0
    #allocation3 [shape = 'u8[12288]{0}', space=vmem, size = 0x3000, scoped, tag = 'input window, operand 0, single buffered']
    #allocation4 [shape = 's32[1]{0}', space=sflag, size = 0x4, scoped, tag = 'scoped memory for tpu_custom_call.1']
    #allocation5 [shape = 's32[1]{0}', space=sflag, size = 0x4, scoped, tag = 'scoped memory for tpu_custom_call.1']
    #allocation6 [shape = 'u8[196608]{0}', space=vmem, size = 0x30000, scoped, tag = 'input window, operand 2, single buffered']
    #allocation7 [shape = 's32[1]{0}', space=sflag, size = 0x4, scoped, tag = 'scoped memory for tpu_custom_call.1']
    #allocation8 [shape = 'u8[4096]{0}', space=vmem, size = 0x1000, scoped, tag = 'output window, operand 0, single buffered']
    %9 = vsyncpa [#allocation4], 0
    %10 = vsyncpa [#allocation7], 0
    %11 = vsyncpa [#allocation5], 0
    // Predicated region
    $region2: #{tpu_custom_call.1} parent=1 // pred_check
      _
    $region3: #{tpu_custom_call.1} parent=1 // pred_check_branch
      %13 = sbr.rel (0) target = $region5
    $region4: #{tpu_custom_call.1} parent=1 // pred_region
      %s15 = ssub.s32 384, 384
      %16 = vsyncadd [#allocation4], %s15
      %s18 = sshll.u32 [#allocation3], 4
      %s19 = int_to_ptr.vmem [resolvable:$true] %s18
      %21 = dma.hbm_to_vmem [thread:$0]  %s0, 384, %s19, [#allocation4]
    $region5: #{tpu_custom_call.1} parent=1 // pred_fallthru
      _
    // Predicated region
    $region6: #{tpu_custom_call.1} parent=1 // pred_check
      _
    $region7: #{tpu_custom_call.1} parent=1 // pred_check_branch
      %23 = sbr.rel (0) target = $region9
    $region8: #{tpu_custom_call.1} parent=1 // pred_region
      _
    $region9: #{tpu_custom_call.1} parent=1 // pred_fallthru
      _
    // Predicated region
    $region10: #{tpu_custom_call.1} parent=1 // pred_check
      _
    $region11: #{tpu_custom_call.1} parent=1 // pred_check_branch
      %25 = sbr.rel (0) target = $region13
    $region12: #{tpu_custom_call.1} parent=1 // pred_region
      %s27 = ssub.s32 6144, 6144
      %28 = vsyncadd [#allocation7], %s27
      %s29 = sshll.u32 [#allocation6], 4
      %s30 = int_to_ptr.vmem [resolvable:$true] %s29
      %35 = dma.hbm_to_vmem [thread:$0]  %s2, 6144, %s30, [#allocation7], 384, 384, 24
    $region13: #{tpu_custom_call.1} parent=1 // pred_fallthru
      _
    // Predicated region
    $region14: #{tpu_custom_call.1} parent=1 // pred_check
      _
    $region15: #{tpu_custom_call.1} parent=1 // pred_check_branch
      %37 = sbr.rel (0) target = $region17
    $region16: #{tpu_custom_call.1} parent=1 // pred_region
      _
    $region17: #{tpu_custom_call.1} parent=1 // pred_fallthru
      _
    // Predicated region
    $region18: #{tpu_custom_call.1} parent=1 // pred_check
      _
    $region19: #{tpu_custom_call.1} parent=1 // pred_check_branch
      %39 = sbr.rel (0) target = $region21
    $region20: #{tpu_custom_call.1} parent=1 // pred_region
      %40 = dma.done [#allocation4], 384
    $region21: #{tpu_custom_call.1} parent=1 // pred_fallthru
      _
    // Predicated region
    $region22: #{tpu_custom_call.1} parent=1 // pred_check
      _
    $region23: #{tpu_custom_call.1} parent=1 // pred_check_branch
      %42 = sbr.rel (0) target = $region25
    $region24: #{tpu_custom_call.1} parent=1 // pred_region
      %43 = dma.done [#allocation7], 6144
    $region25: #{tpu_custom_call.1} parent=1 // pred_fallthru
      _
    %p44 = scmp.eq.s32.totalorder 0, 0
    // Predicated region
    $region26: #{tpu_custom_call.1} parent=1 // pred_check
      %p45 = pneg %p44
    $region27: #{tpu_custom_call.1} parent=1 // pred_check_branch
      %47 = sbr.rel (%p45) target = $region29
    $region28: #{tpu_custom_call.1} parent=1 // pred_region
      %v48 = vld [vmem:[%s1] sm:$0x1]
      %49 = vst [vmem:[#allocation2] sm:$0x1] %v48
    $region29: #{tpu_custom_call.1} parent=1 // pred_fallthru
      _
    %v50 = vld [vmem:[#allocation6] sm:$0xff]
    %v51 = vld [vmem:[#allocation6 + $0x8] sm:$0xff]
    %v52 = vld [vmem:[#allocation6 + $0x10] sm:$0xff]
    %v53 = vld [vmem:[#allocation6 + $0x18] sm:$0xff]
    %v54 = vld [vmem:[#allocation6 + $0x20] sm:$0xff]
    %v55 = vld [vmem:[#allocation6 + $0x28] sm:$0xff]
    %v56 = vld [vmem:[#allocation6 + $0x30] sm:$0xff]
    %v57 = vld [vmem:[#allocation6 + $0x38] sm:$0xff]
    %v58 = vld [vmem:[#allocation6 + $0x40] sm:$0xff]
    %v59 = vld [vmem:[#allocation6 + $0x48] sm:$0xff]
    %v60 = vld [vmem:[#allocation6 + $0x50] sm:$0xff]
    %v61 = vld [vmem:[#allocation6 + $0x58] sm:$0xff]
    %v62 = vld [vmem:[#allocation6 + $0x60] sm:$0xff]
    %v63 = vld [vmem:[#allocation6 + $0x68] sm:$0xff]
    %v64 = vld [vmem:[#allocation6 + $0x70] sm:$0xff]
    %v65 = vld [vmem:[#allocation6 + $0x78] sm:$0xff]
    %v66 = vld [vmem:[#allocation6 + $0x80] sm:$0xff]
    %v67 = vld [vmem:[#allocation6 + $0x88] sm:$0xff]
    %v68 = vld [vmem:[#allocation6 + $0x90] sm:$0xff]
    %v69 = vld [vmem:[#allocation6 + $0x98] sm:$0xff]
    %v70 = vld [vmem:[#allocation6 + $0xa0] sm:$0xff]
    %v71 = vld [vmem:[#allocation6 + $0xa8] sm:$0xff]
    %v72 = vld [vmem:[#allocation6 + $0xb0] sm:$0xff]
    %v73 = vld [vmem:[#allocation6 + $0xb8] sm:$0xff]
    %v74 = vld [vmem:[#allocation6 + $0xc0] sm:$0xff]
    %v75 = vld [vmem:[#allocation6 + $0xc8] sm:$0xff]
    %v76 = vld [vmem:[#allocation6 + $0xd0] sm:$0xff]
    %v77 = vld [vmem:[#allocation6 + $0xd8] sm:$0xff]
    %v78 = vld [vmem:[#allocation6 + $0xe0] sm:$0xff]
    %v79 = vld [vmem:[#allocation6 + $0xe8] sm:$0xff]
    %v80 = vld [vmem:[#allocation6 + $0xf0] sm:$0xff]
    %v81 = vld [vmem:[#allocation6 + $0xf8] sm:$0xff]
    %v82 = vld [vmem:[#allocation6 + $0x100] sm:$0xff]
    %v83 = vld [vmem:[#allocation6 + $0x108] sm:$0xff]
    %v84 = vld [vmem:[#allocation6 + $0x110] sm:$0xff]
    %v85 = vld [vmem:[#allocation6 + $0x118] sm:$0xff]
    %v86 = vld [vmem:[#allocation6 + $0x120] sm:$0xff]
    %v87 = vld [vmem:[#allocation6 + $0x128] sm:$0xff]
    %v88 = vld [vmem:[#allocation6 + $0x130] sm:$0xff]
    %v89 = vld [vmem:[#allocation6 + $0x138] sm:$0xff]
    %v90 = vld [vmem:[#allocation6 + $0x140] sm:$0xff]
    %v91 = vld [vmem:[#allocation6 + $0x148] sm:$0xff]
    %v92 = vld [vmem:[#allocation6 + $0x150] sm:$0xff]
    %v93 = vld [vmem:[#allocation6 + $0x158] sm:$0xff]
    %v94 = vld [vmem:[#allocation6 + $0x160] sm:$0xff]
    %v95 = vld [vmem:[#allocation6 + $0x168] sm:$0xff]
    %v96 = vld [vmem:[#allocation6 + $0x170] sm:$0xff]
    %v97 = vld [vmem:[#allocation6 + $0x178] sm:$0xff]
    %v98 = vld [vmem:[%s3] sm:$0x7]
    %v99 = vld [vmem:[#allocation2] sm:$0x1]
    %v100 = vld [vmem:[#allocation3] ss:$8 sm:$0x7]
    %v102 = vlaneseq
    %v103 = vshrl.u32 %v102, 7
    %v104 = vsub.s32 0, %v103
    %v105 = vrot.slane %v98, %v104
    %v106 = vlaneseq
    %v107 = vshrl.u32 %v106, 7
    %v108 = vsub.s32 1, %v107
    %v109 = vrot.slane %v98, %v108
    %v110 = vlaneseq
    %v111 = vshrl.u32 %v110, 7
    %v112 = vsub.s32 2, %v111
    %v113 = vrot.slane %v98, %v112
    %117 = vmatprep.subr.mxu0 %v51
    %118 = vmatpush1.msra.mxu0 %v50
    %119 = vmatprep.subr.mxu0 %v54
    %120 = vmatpush1.msra.mxu0 %v53
    %121 = vmatprep.subr.mxu0 %v57
    %122 = vmatpush1.msra.mxu0 %v56
    %123 = vmatprep.subr.mxu0 %v60
    %124 = vmatpush1.msra.mxu0 %v59
    %125 = vmatprep.subr.mxu0 %v63
    %126 = vmatpush1.msra.mxu0 %v62
    %127 = vmatprep.subr.mxu0 %v66
    %128 = vmatpush1.msra.mxu0 %v65
    %129 = vmatprep.subr.mxu0 %v69
    %130 = vmatpush1.msra.mxu0 %v68
    %131 = vmatprep.subr.mxu0 %v72
    %132 = vmatpush1.msra.mxu0 %v71
    %133 = vmatprep.subr.mxu0 %v75
    %134 = vmatpush1.msra.mxu0 %v74
    %135 = vmatprep.subr.mxu0 %v78
    %136 = vmatpush1.msra.mxu0 %v77
    %137 = vmatprep.subr.mxu0 %v81
    %138 = vmatpush1.msra.mxu0 %v80
    %139 = vmatprep.subr.mxu0 %v84
    %140 = vmatpush1.msra.mxu0 %v83
    %141 = vmatprep.subr.mxu0 %v87
    %142 = vmatpush1.msra.mxu0 %v86
    %143 = vmatprep.subr.mxu0 %v90
    %144 = vmatpush1.msra.mxu0 %v89
    %145 = vmatprep.subr.mxu0 %v93
    %146 = vmatpush1.msra.mxu0 %v92
    %147 = vmatprep.subr.mxu0 %v96
    %148 = vmatpush1.msra.mxu0 %v95
    %149 = vmatprep.subr.mxu0 0.0
    %150 = vmatpush1.msra.mxu0 0.0
    %151 = vmatprep.subr.mxu0 0.0
    %152 = vmatpush1.msra.mxu0 0.0
    %153 = vmatprep.subr.mxu0 0.0
    %154 = vmatpush1.msra.mxu0 0.0
    %155 = vmatprep.subr.mxu0 0.0
    %156 = vmatpush1.msra.mxu0 0.0
    %157 = vmatprep.subr.mxu0 0.0
    %158 = vmatpush1.msra.mxu0 0.0
    %159 = vmatprep.subr.mxu0 0.0
    %160 = vmatpush1.msra.mxu0 0.0
    %161 = vmatprep.subr.mxu0 0.0
    %162 = vmatpush1.msra.mxu0 0.0
    %163 = vmatprep.subr.mxu0 0.0
    %164 = vmatpush1.msra.mxu0 0.0
    %165 = vmatprep.subr.mxu0 0.0
    %166 = vmatpush1.msra.mxu0 0.0
    %167 = vmatprep.subr.mxu0 0.0
    %168 = vmatpush1.msra.mxu0 0.0
    %169 = vmatprep.subr.mxu0 0.0
    %170 = vmatpush1.msra.mxu0 0.0
    %171 = vmatprep.subr.mxu0 0.0
    %172 = vmatpush1.msra.mxu0 0.0
    %173 = vmatprep.subr.mxu0 0.0
    %174 = vmatpush1.msra.mxu0 0.0
    %175 = vmatprep.subr.mxu0 0.0
    %176 = vmatpush1.msra.mxu0 0.0
    %177 = vmatprep.subr.mxu0 0.0
    %178 = vmatpush1.msra.mxu0 0.0
    %179 = vmatprep.subr.mxu0 0.0
    %180 = vmatpush1.msra.mxu0 0.0
    %181 = vmatprep.mubr.f32.mxu0 0.0
    %182 = vmatmul.mubr.f32.gmra.mrb[0].mxu0 %v99
    %v183 = vpop.f32.mrb[0].mxu0
    %v184 = vadd.f32 %v105, %v183
    %v185 = vpop.f32.mrb[0].mxu0
    %v186 = vadd.f32 %v109, %v185
    %187 = vdwg.mxu0
    %188 = vmatprep.subr.mxu0 0.0
    %189 = vmatpush1.msra.mxu0 %v52
    %190 = vmatprep.subr.mxu0 0.0
    %191 = vmatpush1.msra.mxu0 %v55
    %192 = vmatprep.subr.mxu0 0.0
    %193 = vmatpush1.msra.mxu0 %v58
    %194 = vmatprep.subr.mxu0 0.0
    %195 = vmatpush1.msra.mxu0 %v61
    %196 = vmatprep.subr.mxu0 0.0
    %197 = vmatpush1.msra.mxu0 %v64
    %198 = vmatprep.subr.mxu0 0.0
    %199 = vmatpush1.msra.mxu0 %v67
    %200 = vmatprep.subr.mxu0 0.0
    %201 = vmatpush1.msra.mxu0 %v70
    %202 = vmatprep.subr.mxu0 0.0
    %203 = vmatpush1.msra.mxu0 %v73
    %204 = vmatprep.subr.mxu0 0.0
    %205 = vmatpush1.msra.mxu0 %v76
    %206 = vmatprep.subr.mxu0 0.0
    %207 = vmatpush1.msra.mxu0 %v79
    %208 = vmatprep.subr.mxu0 0.0
    %209 = vmatpush1.msra.mxu0 %v82
    %210 = vmatprep.subr.mxu0 0.0
    %211 = vmatpush1.msra.mxu0 %v85
    %212 = vmatprep.subr.mxu0 0.0
    %213 = vmatpush1.msra.mxu0 %v88
    %214 = vmatprep.subr.mxu0 0.0
    %215 = vmatpush1.msra.mxu0 %v91
    %216 = vmatprep.subr.mxu0 0.0
    %217 = vmatpush1.msra.mxu0 %v94
    %218 = vmatprep.subr.mxu0 0.0
    %219 = vmatpush1.msra.mxu0 %v97
    %220 = vmatprep.subr.mxu0 0.0
    %221 = vmatpush1.msra.mxu0 0.0
    %222 = vmatprep.subr.mxu0 0.0
    %223 = vmatpush1.msra.mxu0 0.0
    %224 = vmatprep.subr.mxu0 0.0
    %225 = vmatpush1.msra.mxu0 0.0
    %226 = vmatprep.subr.mxu0 0.0
    %227 = vmatpush1.msra.mxu0 0.0
    %228 = vmatprep.subr.mxu0 0.0
    %229 = vmatpush1.msra.mxu0 0.0
    %230 = vmatprep.subr.mxu0 0.0
    %231 = vmatpush1.msra.mxu0 0.0
    %232 = vmatprep.subr.mxu0 0.0
    %233 = vmatpush1.msra.mxu0 0.0
    %234 = vmatprep.subr.mxu0 0.0
    %235 = vmatpush1.msra.mxu0 0.0
    %236 = vmatprep.subr.mxu0 0.0
    %237 = vmatpush1.msra.mxu0 0.0
    %238 = vmatprep.subr.mxu0 0.0
    %239 = vmatpush1.msra.mxu0 0.0
    %240 = vmatprep.subr.mxu0 0.0
    %241 = vmatpush1.msra.mxu0 0.0
    %242 = vmatprep.subr.mxu0 0.0
    %243 = vmatpush1.msra.mxu0 0.0
    %244 = vmatprep.subr.mxu0 0.0
    %245 = vmatpush1.msra.mxu0 0.0
    %246 = vmatprep.subr.mxu0 0.0
    %247 = vmatpush1.msra.mxu0 0.0
    %248 = vmatprep.subr.mxu0 0.0
    %249 = vmatpush1.msra.mxu0 0.0
    %250 = vmatprep.subr.mxu0 0.0
    %251 = vmatpush1.msra.mxu0 0.0
    %252 = vmatprep.mubr.f32.mxu0 0.0
    %253 = vmatmul.mubr.f32.gmra.mrb[0].mxu0 %v99
    %v254 = vpop.f32.mrb[0].mxu0
    %v255 = vadd.f32 %v113, %v254
    %v256 = vpop.f32.mrb[0].mxu0
    %257 = vdwg.mxu0
    %v258 = vadd.f32 %v100, %v184
    %v259 = vxor.u32 %v258, 2147483648
    %v260 = vmul.f32 %v259, 1.442695
    %v261 = vpow.pop %v260
    %v262 = vadd.f32 %v261, 1.0
    %v263 = vrcp.pop %v262
    %v264 = vmul.f32 1.0, %v263
    %v266 = vrot.slane %v100, 1
    %v268 = vadd.f32 %v266, %v186
    %v269 = vxor.u32 %v268, 2147483648
    %v270 = vmul.f32 %v269, 1.442695
    %v271 = vpow.pop %v270
    %v272 = vadd.f32 %v271, 1.0
    %v273 = vrcp.pop %v272
    %v274 = vmul.f32 1.0, %v273
    %v275 = vmul.f32 %v264, %v255
    %v276 = vrot.slane %v100, 2
    %v278 = vadd.f32 %v276, %v275
    %v279 = vtanh.pop %v278
    %v280 = vsub.f32 1.0, %v274
    %v281 = vmul.f32 %v280, %v279
    %v282 = vmul.f32 %v274, %v99
    %v283 = vadd.f32 %v281, %v282
    %284 = vst [vmem:[#allocation8] sm:$0x1] %v283
    %s285 = scalar_lea.vmem [#allocation3], 1
    %v286 = vld [vmem:[%s285] ss:$8 sm:$0x7]
    %287 = vmatprep.subr.mxu0 %v51
    %288 = vmatpush1.msra.mxu0 %v50
    %289 = vmatprep.subr.mxu0 %v54
    %290 = vmatpush1.msra.mxu0 %v53
    %291 = vmatprep.subr.mxu0 %v57
    %292 = vmatpush1.msra.mxu0 %v56
    %293 = vmatprep.subr.mxu0 %v60
    %294 = vmatpush1.msra.mxu0 %v59
    %295 = vmatprep.subr.mxu0 %v63
    %296 = vmatpush1.msra.mxu0 %v62
    %297 = vmatprep.subr.mxu0 %v66
    %298 = vmatpush1.msra.mxu0 %v65
    %299 = vmatprep.subr.mxu0 %v69
    %300 = vmatpush1.msra.mxu0 %v68
    %301 = vmatprep.subr.mxu0 %v72
    %302 = vmatpush1.msra.mxu0 %v71
    %303 = vmatprep.subr.mxu0 %v75
    %304 = vmatpush1.msra.mxu0 %v74
    %305 = vmatprep.subr.mxu0 %v78
    %306 = vmatpush1.msra.mxu0 %v77
    %307 = vmatprep.subr.mxu0 %v81
    %308 = vmatpush1.msra.mxu0 %v80
    %309 = vmatprep.subr.mxu0 %v84
    %310 = vmatpush1.msra.mxu0 %v83
    %311 = vmatprep.subr.mxu0 %v87
    %312 = vmatpush1.msra.mxu0 %v86
    %313 = vmatprep.subr.mxu0 %v90
    %314 = vmatpush1.msra.mxu0 %v89
    %315 = vmatprep.subr.mxu0 %v93
    %316 = vmatpush1.msra.mxu0 %v92
    %317 = vmatprep.subr.mxu0 %v96
    %318 = vmatpush1.msra.mxu0 %v95
    %319 = vmatprep.subr.mxu0 0.0
    %320 = vmatpush1.msra.mxu0 0.0
    %321 = vmatprep.subr.mxu0 0.0
    %322 = vmatpush1.msra.mxu0 0.0
    %323 = vmatprep.subr.mxu0 0.0
    %324 = vmatpush1.msra.mxu0 0.0
    %325 = vmatprep.subr.mxu0 0.0
    %326 = vmatpush1.msra.mxu0 0.0
    %327 = vmatprep.subr.mxu0 0.0
    %328 = vmatpush1.msra.mxu0 0.0
    %329 = vmatprep.subr.mxu0 0.0
    %330 = vmatpush1.msra.mxu0 0.0
    %331 = vmatprep.subr.mxu0 0.0
    %332 = vmatpush1.msra.mxu0 0.0
    %333 = vmatprep.subr.mxu0 0.0
    %334 = vmatpush1.msra.mxu0 0.0
    %335 = vmatprep.subr.mxu0 0.0
    %336 = vmatpush1.msra.mxu0 0.0
    %337 = vmatprep.subr.mxu0 0.0
    %338 = vmatpush1.msra.mxu0 0.0
    %339 = vmatprep.subr.mxu0 0.0
    %340 = vmatpush1.msra.mxu0 0.0
    %341 = vmatprep.subr.mxu0 0.0
    %342 = vmatpush1.msra.mxu0 0.0
    %343 = vmatprep.subr.mxu0 0.0
    %344 = vmatpush1.msra.mxu0 0.0
    %345 = vmatprep.subr.mxu0 0.0
    %346 = vmatpush1.msra.mxu0 0.0
    %347 = vmatprep.subr.mxu0 0.0
    %348 = vmatpush1.msra.mxu0 0.0
    %349 = vmatprep.subr.mxu0 0.0
    %350 = vmatpush1.msra.mxu0 0.0
    %351 = vmatprep.mubr.f32.mxu0 0.0
    %352 = vmatmul.mubr.f32.gmra.mrb[0].mxu0 %v283
    %v353 = vpop.f32.mrb[0].mxu0
    %v354 = vadd.f32 %v105, %v353
    %v355 = vpop.f32.mrb[0].mxu0
    %v356 = vadd.f32 %v109, %v355
    %357 = vdwg.mxu0
    %358 = vmatprep.subr.mxu0 0.0
    %359 = vmatpush1.msra.mxu0 %v52
    %360 = vmatprep.subr.mxu0 0.0
    %361 = vmatpush1.msra.mxu0 %v55
    %362 = vmatprep.subr.mxu0 0.0
    %363 = vmatpush1.msra.mxu0 %v58
    %364 = vmatprep.subr.mxu0 0.0
    %365 = vmatpush1.msra.mxu0 %v61
    %366 = vmatprep.subr.mxu0 0.0
    %367 = vmatpush1.msra.mxu0 %v64
    %368 = vmatprep.subr.mxu0 0.0
    %369 = vmatpush1.msra.mxu0 %v67
    %370 = vmatprep.subr.mxu0 0.0
    %371 = vmatpush1.msra.mxu0 %v70
    %372 = vmatprep.subr.mxu0 0.0
    %373 = vmatpush1.msra.mxu0 %v73
    %374 = vmatprep.subr.mxu0 0.0
    %375 = vmatpush1.msra.mxu0 %v76
    %376 = vmatprep.subr.mxu0 0.0
    %377 = vmatpush1.msra.mxu0 %v79
    %378 = vmatprep.subr.mxu0 0.0
    %379 = vmatpush1.msra.mxu0 %v82
    %380 = vmatprep.subr.mxu0 0.0
    %381 = vmatpush1.msra.mxu0 %v85
    %382 = vmatprep.subr.mxu0 0.0
    %383 = vmatpush1.msra.mxu0 %v88
    %384 = vmatprep.subr.mxu0 0.0
    %385 = vmatpush1.msra.mxu0 %v91
    %386 = vmatprep.subr.mxu0 0.0
    %387 = vmatpush1.msra.mxu0 %v94
    %388 = vmatprep.subr.mxu0 0.0
    %389 = vmatpush1.msra.mxu0 %v97
    %390 = vmatprep.subr.mxu0 0.0
    %391 = vmatpush1.msra.mxu0 0.0
    %392 = vmatprep.subr.mxu0 0.0
    %393 = vmatpush1.msra.mxu0 0.0
    %394 = vmatprep.subr.mxu0 0.0
    %395 = vmatpush1.msra.mxu0 0.0
    %396 = vmatprep.subr.mxu0 0.0
    %397 = vmatpush1.msra.mxu0 0.0
    %398 = vmatprep.subr.mxu0 0.0
    %399 = vmatpush1.msra.mxu0 0.0
    %400 = vmatprep.subr.mxu0 0.0
    %401 = vmatpush1.msra.mxu0 0.0
    %402 = vmatprep.subr.mxu0 0.0
    %403 = vmatpush1.msra.mxu0 0.0
    %404 = vmatprep.subr.mxu0 0.0
    %405 = vmatpush1.msra.mxu0 0.0
    %406 = vmatprep.subr.mxu0 0.0
    %407 = vmatpush1.msra.mxu0 0.0
    %408 = vmatprep.subr.mxu0 0.0
    %409 = vmatpush1.msra.mxu0 0.0
    %410 = vmatprep.subr.mxu0 0.0
    %411 = vmatpush1.msra.mxu0 0.0
    %412 = vmatprep.subr.mxu0 0.0
    %413 = vmatpush1.msra.mxu0 0.0
    %414 = vmatprep.subr.mxu0 0.0
    %415 = vmatpush1.msra.mxu0 0.0
    %416 = vmatprep.subr.mxu0 0.0
    %417 = vmatpush1.msra.mxu0 0.0
    %418 = vmatprep.subr.mxu0 0.0
    %419 = vmatpush1.msra.mxu0 0.0
    %420 = vmatprep.subr.mxu0 0.0
    %421 = vmatpush1.msra.mxu0 0.0
    %422 = vmatprep.mubr.f32.mxu0 0.0
    %423 = vmatmul.mubr.f32.gmra.mrb[0].mxu0 %v283
    %v424 = vpop.f32.mrb[0].mxu0
    %v425 = vadd.f32 %v113, %v424
    %v426 = vpop.f32.mrb[0].mxu0
    %427 = vdwg.mxu0
    %v428 = vadd.f32 %v286, %v354
    %v429 = vxor.u32 %v428, 2147483648
    %v430 = vmul.f32 %v429, 1.442695
    %v431 = vpow.pop %v430
    %v432 = vadd.f32 %v431, 1.0
    %v433 = vrcp.pop %v432
    %v434 = vmul.f32 1.0, %v433
    %v436 = vrot.slane %v286, 1
    %v438 = vadd.f32 %v436, %v356
    %v439 = vxor.u32 %v438, 2147483648
    %v440 = vmul.f32 %v439, 1.442695
    %v441 = vpow.pop %v440
    %v442 = vadd.f32 %v441, 1.0
    %v443 = vrcp.pop %v442
    %v444 = vmul.f32 1.0, %v443
    %v445 = vmul.f32 %v434, %v425
    %v446 = vrot.slane %v286, 2
    %v448 = vadd.f32 %v446, %v445
    %v449 = vtanh.pop %v448
    %v450 = vsub.f32 1.0, %v444
    %v451 = vmul.f32 %v450, %v449
    %v452 = vmul.f32 %v444, %v283
    %v453 = vadd.f32 %v451, %v452
    %454 = vst [vmem:[#allocation8 + $0x1] sm:$0x1] %v453
    %s455 = scalar_lea.vmem [#allocation3], 2
    %v456 = vld [vmem:[%s455] ss:$8 sm:$0x7]
    %457 = vmatprep.subr.mxu0 %v51
    %458 = vmatpush1.msra.mxu0 %v50
    %459 = vmatprep.subr.mxu0 %v54
    %460 = vmatpush1.msra.mxu0 %v53
    %461 = vmatprep.subr.mxu0 %v57
    %462 = vmatpush1.msra.mxu0 %v56
    %463 = vmatprep.subr.mxu0 %v60
    %464 = vmatpush1.msra.mxu0 %v59
    %465 = vmatprep.subr.mxu0 %v63
    %466 = vmatpush1.msra.mxu0 %v62
    %467 = vmatprep.subr.mxu0 %v66
    %468 = vmatpush1.msra.mxu0 %v65
    %469 = vmatprep.subr.mxu0 %v69
    %470 = vmatpush1.msra.mxu0 %v68
    %471 = vmatprep.subr.mxu0 %v72
    %472 = vmatpush1.msra.mxu0 %v71
    %473 = vmatprep.subr.mxu0 %v75
    %474 = vmatpush1.msra.mxu0 %v74
    %475 = vmatprep.subr.mxu0 %v78
    %476 = vmatpush1.msra.mxu0 %v77
    %477 = vmatprep.subr.mxu0 %v81
    %478 = vmatpush1.msra.mxu0 %v80
    %479 = vmatprep.subr.mxu0 %v84
    %480 = vmatpush1.msra.mxu0 %v83
    %481 = vmatprep.subr.mxu0 %v87
    %482 = vmatpush1.msra.mxu0 %v86
    %483 = vmatprep.subr.mxu0 %v90
    %484 = vmatpush1.msra.mxu0 %v89
    %485 = vmatprep.subr.mxu0 %v93
    %486 = vmatpush1.msra.mxu0 %v92
    %487 = vmatprep.subr.mxu0 %v96
    %488 = vmatpush1.msra.mxu0 %v95
    %489 = vmatprep.subr.mxu0 0.0
    %490 = vmatpush1.msra.mxu0 0.0
    %491 = vmatprep.subr.mxu0 0.0
    %492 = vmatpush1.msra.mxu0 0.0
    %493 = vmatprep.subr.mxu0 0.0
    %494 = vmatpush1.msra.mxu0 0.0
    %495 = vmatprep.subr.mxu0 0.0
    %496 = vmatpush1.msra.mxu0 0.0
    %497 = vmatprep.subr.mxu0 0.0
    %498 = vmatpush1.msra.mxu0 0.0
    %499 = vmatprep.subr.mxu0 0.0
    %500 = vmatpush1.msra.mxu0 0.0
    %501 = vmatprep.subr.mxu0 0.0
    %502 = vmatpush1.msra.mxu0 0.0
    %503 = vmatprep.subr.mxu0 0.0
    %504 = vmatpush1.msra.mxu0 0.0
    %505 = vmatprep.subr.mxu0 0.0
    %506 = vmatpush1.msra.mxu0 0.0
    %507 = vmatprep.subr.mxu0 0.0
    %508 = vmatpush1.msra.mxu0 0.0
    %509 = vmatprep.subr.mxu0 0.0
    %510 = vmatpush1.msra.mxu0 0.0
    %511 = vmatprep.subr.mxu0 0.0
    %512 = vmatpush1.msra.mxu0 0.0
    %513 = vmatprep.subr.mxu0 0.0
    %514 = vmatpush1.msra.mxu0 0.0
    %515 = vmatprep.subr.mxu0 0.0
    %516 = vmatpush1.msra.mxu0 0.0
    %517 = vmatprep.subr.mxu0 0.0
    %518 = vmatpush1.msra.mxu0 0.0
    %519 = vmatprep.subr.mxu0 0.0
    %520 = vmatpush1.msra.mxu0 0.0
    %521 = vmatprep.mubr.f32.mxu0 0.0
    %522 = vmatmul.mubr.f32.gmra.mrb[0].mxu0 %v453
    %v523 = vpop.f32.mrb[0].mxu0
    %v524 = vadd.f32 %v105, %v523
    %v525 = vpop.f32.mrb[0].mxu0
    %v526 = vadd.f32 %v109, %v525
    %527 = vdwg.mxu0
    %528 = vmatprep.subr.mxu0 0.0
    %529 = vmatpush1.msra.mxu0 %v52
    %530 = vmatprep.subr.mxu0 0.0
    %531 = vmatpush1.msra.mxu0 %v55
    %532 = vmatprep.subr.mxu0 0.0
    %533 = vmatpush1.msra.mxu0 %v58
    %534 = vmatprep.subr.mxu0 0.0
    %535 = vmatpush1.msra.mxu0 %v61
    %536 = vmatprep.subr.mxu0 0.0
    %537 = vmatpush1.msra.mxu0 %v64
    %538 = vmatprep.subr.mxu0 0.0
    %539 = vmatpush1.msra.mxu0 %v67
    %540 = vmatprep.subr.mxu0 0.0
    %541 = vmatpush1.msra.mxu0 %v70
    %542 = vmatprep.subr.mxu0 0.0
    %543 = vmatpush1.msra.mxu0 %v73
    %544 = vmatprep.subr.mxu0 0.0
    %545 = vmatpush1.msra.mxu0 %v76
    %546 = vmatprep.subr.mxu0 0.0
    %547 = vmatpush1.msra.mxu0 %v79
    %548 = vmatprep.subr.mxu0 0.0
    %549 = vmatpush1.msra.mxu0 %v82
    %550 = vmatprep.subr.mxu0 0.0
    %551 = vmatpush1.msra.mxu0 %v85
    %552 = vmatprep.subr.mxu0 0.0
    %553 = vmatpush1.msra.mxu0 %v88
    %554 = vmatprep.subr.mxu0 0.0
    %555 = vmatpush1.msra.mxu0 %v91
    %556 = vmatprep.subr.mxu0 0.0
    %557 = vmatpush1.msra.mxu0 %v94
    %558 = vmatprep.subr.mxu0 0.0
    %559 = vmatpush1.msra.mxu0 %v97
    %560 = vmatprep.subr.mxu0 0.0
    %561 = vmatpush1.msra.mxu0 0.0
    %562 = vmatprep.subr.mxu0 0.0
    %563 = vmatpush1.msra.mxu0 0.0
    %564 = vmatprep.subr.mxu0 0.0
    %565 = vmatpush1.msra.mxu0 0.0
    %566 = vmatprep.subr.mxu0 0.0
    %567 = vmatpush1.msra.mxu0 0.0
    %568 = vmatprep.subr.mxu0 0.0
    %569 = vmatpush1.msra.mxu0 0.0
    %570 = vmatprep.subr.mxu0 0.0
    %571 = vmatpush1.msra.mxu0 0.0
    %572 = vmatprep.subr.mxu0 0.0
    %573 = vmatpush1.msra.mxu0 0.0
    %574 = vmatprep.subr.mxu0 0.0
    %575 = vmatpush1.msra.mxu0 0.0
    %576 = vmatprep.subr.mxu0 0.0
    %577 = vmatpush1.msra.mxu0 0.0
    %578 = vmatprep.subr.mxu0 0.0
    %579 = vmatpush1.msra.mxu0 0.0
    %580 = vmatprep.subr.mxu0 0.0
    %581 = vmatpush1.msra.mxu0 0.0
    %582 = vmatprep.subr.mxu0 0.0
    %583 = vmatpush1.msra.mxu0 0.0
    %584 = vmatprep.subr.mxu0 0.0
    %585 = vmatpush1.msra.mxu0 0.0
    %586 = vmatprep.subr.mxu0 0.0
    %587 = vmatpush1.msra.mxu0 0.0
    %588 = vmatprep.subr.mxu0 0.0
    %589 = vmatpush1.msra.mxu0 0.0
    %590 = vmatprep.subr.mxu0 0.0
    %591 = vmatpush1.msra.mxu0 0.0
    %592 = vmatprep.mubr.f32.mxu0 0.0
    %593 = vmatmul.mubr.f32.gmra.mrb[0].mxu0 %v453
    %v594 = vpop.f32.mrb[0].mxu0
    %v595 = vadd.f32 %v113, %v594
    %v596 = vpop.f32.mrb[0].mxu0
    %597 = vdwg.mxu0
    %v598 = vadd.f32 %v456, %v524
    %v599 = vxor.u32 %v598, 2147483648
    %v600 = vmul.f32 %v599, 1.442695
    %v601 = vpow.pop %v600
    %v602 = vadd.f32 %v601, 1.0
    %v603 = vrcp.pop %v602
    %v604 = vmul.f32 1.0, %v603
    %v606 = vrot.slane %v456, 1
    %v608 = vadd.f32 %v606, %v526
    %v609 = vxor.u32 %v608, 2147483648
    %v610 = vmul.f32 %v609, 1.442695
    %v611 = vpow.pop %v610
    %v612 = vadd.f32 %v611, 1.0
    %v613 = vrcp.pop %v612
    %v614 = vmul.f32 1.0, %v613
    %v615 = vmul.f32 %v604, %v595
    %v616 = vrot.slane %v456, 2
    %v618 = vadd.f32 %v616, %v615
    %v619 = vtanh.pop %v618
    %v620 = vsub.f32 1.0, %v614
    %v621 = vmul.f32 %v620, %v619
    %v622 = vmul.f32 %v614, %v453
    %v623 = vadd.f32 %v621, %v622
    %624 = vst [vmem:[#allocation8 + $0x2] sm:$0x1] %v623
    %s625 = scalar_lea.vmem [#allocation3], 3
    %v626 = vld [vmem:[%s625] ss:$8 sm:$0x7]
    %627 = vmatprep.subr.mxu0 %v51
    %628 = vmatpush1.msra.mxu0 %v50
    %629 = vmatprep.subr.mxu0 %v54
    %630 = vmatpush1.msra.mxu0 %v53
    %631 = vmatprep.subr.mxu0 %v57
    %632 = vmatpush1.msra.mxu0 %v56
    %633 = vmatprep.subr.mxu0 %v60
    %634 = vmatpush1.msra.mxu0 %v59
    %635 = vmatprep.subr.mxu0 %v63
    %636 = vmatpush1.msra.mxu0 %v62
    %637 = vmatprep.subr.mxu0 %v66
    %638 = vmatpush1.msra.mxu0 %v65
    %639 = vmatprep.subr.mxu0 %v69
    %640 = vmatpush1.msra.mxu0 %v68
    %641 = vmatprep.subr.mxu0 %v72
    %642 = vmatpush1.msra.mxu0 %v71
    %643 = vmatprep.subr.mxu0 %v75
    %644 = vmatpush1.msra.mxu0 %v74
    %645 = vmatprep.subr.mxu0 %v78
    %646 = vmatpush1.msra.mxu0 %v77
    %647 = vmatprep.subr.mxu0 %v81
    %648 = vmatpush1.msra.mxu0 %v80
    %649 = vmatprep.subr.mxu0 %v84
    %650 = vmatpush1.msra.mxu0 %v83
    %651 = vmatprep.subr.mxu0 %v87
    %652 = vmatpush1.msra.mxu0 %v86
    %653 = vmatprep.subr.mxu0 %v90
    %654 = vmatpush1.msra.mxu0 %v89
    %655 = vmatprep.subr.mxu0 %v93
    %656 = vmatpush1.msra.mxu0 %v92
    %657 = vmatprep.subr.mxu0 %v96
    %658 = vmatpush1.msra.mxu0 %v95
    %659 = vmatprep.subr.mxu0 0.0
    %660 = vmatpush1.msra.mxu0 0.0
    %661 = vmatprep.subr.mxu0 0.0
    %662 = vmatpush1.msra.mxu0 0.0
    %663 = vmatprep.subr.mxu0 0.0
    %664 = vmatpush1.msra.mxu0 0.0
    %665 = vmatprep.subr.mxu0 0.0
    %666 = vmatpush1.msra.mxu0 0.0
    %667 = vmatprep.subr.mxu0 0.0
    %668 = vmatpush1.msra.mxu0 0.0
    %669 = vmatprep.subr.mxu0 0.0
    %670 = vmatpush1.msra.mxu0 0.0
    %671 = vmatprep.subr.mxu0 0.0
    %672 = vmatpush1.msra.mxu0 0.0
    %673 = vmatprep.subr.mxu0 0.0
    %674 = vmatpush1.msra.mxu0 0.0
    %675 = vmatprep.subr.mxu0 0.0
    %676 = vmatpush1.msra.mxu0 0.0
    %677 = vmatprep.subr.mxu0 0.0
    %678 = vmatpush1.msra.mxu0 0.0
    %679 = vmatprep.subr.mxu0 0.0
    %680 = vmatpush1.msra.mxu0 0.0
    %681 = vmatprep.subr.mxu0 0.0
    %682 = vmatpush1.msra.mxu0 0.0
    %683 = vmatprep.subr.mxu0 0.0
    %684 = vmatpush1.msra.mxu0 0.0
    %685 = vmatprep.subr.mxu0 0.0
    %686 = vmatpush1.msra.mxu0 0.0
    %687 = vmatprep.subr.mxu0 0.0
    %688 = vmatpush1.msra.mxu0 0.0
    %689 = vmatprep.subr.mxu0 0.0
    %690 = vmatpush1.msra.mxu0 0.0
    %691 = vmatprep.mubr.f32.mxu0 0.0
    %692 = vmatmul.mubr.f32.gmra.mrb[0].mxu0 %v623
    %v693 = vpop.f32.mrb[0].mxu0
    %v694 = vadd.f32 %v105, %v693
    %v695 = vpop.f32.mrb[0].mxu0
    %v696 = vadd.f32 %v109, %v695
    %697 = vdwg.mxu0
    %698 = vmatprep.subr.mxu0 0.0
    %699 = vmatpush1.msra.mxu0 %v52
    %700 = vmatprep.subr.mxu0 0.0
    %701 = vmatpush1.msra.mxu0 %v55
    %702 = vmatprep.subr.mxu0 0.0
    %703 = vmatpush1.msra.mxu0 %v58
    %704 = vmatprep.subr.mxu0 0.0
    %705 = vmatpush1.msra.mxu0 %v61
    %706 = vmatprep.subr.mxu0 0.0
    %707 = vmatpush1.msra.mxu0 %v64
    %708 = vmatprep.subr.mxu0 0.0
    %709 = vmatpush1.msra.mxu0 %v67
    %710 = vmatprep.subr.mxu0 0.0
    %711 = vmatpush1.msra.mxu0 %v70
    %712 = vmatprep.subr.mxu0 0.0
    %713 = vmatpush1.msra.mxu0 %v73
    %714 = vmatprep.subr.mxu0 0.0
    %715 = vmatpush1.msra.mxu0 %v76
    %716 = vmatprep.subr.mxu0 0.0
    %717 = vmatpush1.msra.mxu0 %v79
    %718 = vmatprep.subr.mxu0 0.0
    %719 = vmatpush1.msra.mxu0 %v82
    %720 = vmatprep.subr.mxu0 0.0
    %721 = vmatpush1.msra.mxu0 %v85
    %722 = vmatprep.subr.mxu0 0.0
    %723 = vmatpush1.msra.mxu0 %v88
    %724 = vmatprep.subr.mxu0 0.0
    %725 = vmatpush1.msra.mxu0 %v91
    %726 = vmatprep.subr.mxu0 0.0
    %727 = vmatpush1.msra.mxu0 %v94
    %728 = vmatprep.subr.mxu0 0.0
    %729 = vmatpush1.msra.mxu0 %v97
    %730 = vmatprep.subr.mxu0 0.0
    %731 = vmatpush1.msra.mxu0 0.0
    %732 = vmatprep.subr.mxu0 0.0
    %733 = vmatpush1.msra.mxu0 0.0
    %734 = vmatprep.subr.mxu0 0.0
    %735 = vmatpush1.msra.mxu0 0.0
    %736 = vmatprep.subr.mxu0 0.0
    %737 = vmatpush1.msra.mxu0 0.0
    %738 = vmatprep.subr.mxu0 0.0
    %739 = vmatpush1.msra.mxu0 0.0
    %740 = vmatprep.subr.mxu0 0.0
    %741 = vmatpush1.msra.mxu0 0.0
    %742 = vmatprep.subr.mxu0 0.0
    %743 = vmatpush1.msra.mxu0 0.0
    %744 = vmatprep.subr.mxu0 0.0
    %745 = vmatpush1.msra.mxu0 0.0
    %746 = vmatprep.subr.mxu0 0.0
    %747 = vmatpush1.msra.mxu0 0.0
    %748 = vmatprep.subr.mxu0 0.0
    %749 = vmatpush1.msra.mxu0 0.0
    %750 = vmatprep.subr.mxu0 0.0
    %751 = vmatpush1.msra.mxu0 0.0
    %752 = vmatprep.subr.mxu0 0.0
    %753 = vmatpush1.msra.mxu0 0.0
    %754 = vmatprep.subr.mxu0 0.0
    %755 = vmatpush1.msra.mxu0 0.0
    %756 = vmatprep.subr.mxu0 0.0
    %757 = vmatpush1.msra.mxu0 0.0
    %758 = vmatprep.subr.mxu0 0.0
    %759 = vmatpush1.msra.mxu0 0.0
    %760 = vmatprep.subr.mxu0 0.0
    %761 = vmatpush1.msra.mxu0 0.0
    %762 = vmatprep.mubr.f32.mxu0 0.0
    %763 = vmatmul.mubr.f32.gmra.mrb[0].mxu0 %v623
    %v764 = vpop.f32.mrb[0].mxu0
    %v765 = vadd.f32 %v113, %v764
    %v766 = vpop.f32.mrb[0].mxu0
    %767 = vdwg.mxu0
    %v768 = vadd.f32 %v626, %v694
    %v769 = vxor.u32 %v768, 2147483648
    %v770 = vmul.f32 %v769, 1.442695
    %v771 = vpow.pop %v770
    %v772 = vadd.f32 %v771, 1.0
    %v773 = vrcp.pop %v772
    %v774 = vmul.f32 1.0, %v773
    %v776 = vrot.slane %v626, 1
    %v778 = vadd.f32 %v776, %v696
    %v779 = vxor.u32 %v778, 2147483648
    %v780 = vmul.f32 %v779, 1.442695
    %v781 = vpow.pop %v780
    %v782 = vadd.f32 %v781, 1.0
    %v783 = vrcp.pop %v782
    %v784 = vmul.f32 1.0, %v783
    %v785 = vmul.f32 %v774, %v765
    %v786 = vrot.slane %v626, 2
    %v788 = vadd.f32 %v786, %v785
    %v789 = vtanh.pop %v788
    %v790 = vsub.f32 1.0, %v784
    %v791 = vmul.f32 %v790, %v789
    %v792 = vmul.f32 %v784, %v623
    %v793 = vadd.f32 %v791, %v792
    %794 = vst [vmem:[#allocation8 + $0x3] sm:$0x1] %v793
    %s795 = scalar_lea.vmem [#allocation3], 4
    %v796 = vld [vmem:[%s795] ss:$8 sm:$0x7]
    %797 = vmatprep.subr.mxu0 %v51
    %798 = vmatpush1.msra.mxu0 %v50
    %799 = vmatprep.subr.mxu0 %v54
    %800 = vmatpush1.msra.mxu0 %v53
    %801 = vmatprep.subr.mxu0 %v57
    %802 = vmatpush1.msra.mxu0 %v56
    %803 = vmatprep.subr.mxu0 %v60
    %804 = vmatpush1.msra.mxu0 %v59
    %805 = vmatprep.subr.mxu0 %v63
    %806 = vmatpush1.msra.mxu0 %v62
    %807 = vmatprep.subr.mxu0 %v66
    %808 = vmatpush1.msra.mxu0 %v65
    %809 = vmatprep.subr.mxu0 %v69
    %810 = vmatpush1.msra.mxu0 %v68
    %811 = vmatprep.subr.mxu0 %v72
    %812 = vmatpush1.msra.mxu0 %v71
    %813 = vmatprep.subr.mxu0 %v75
    %814 = vmatpush1.msra.mxu0 %v74
    %815 = vmatprep.subr.mxu0 %v78
    %816 = vmatpush1.msra.mxu0 %v77
    %817 = vmatprep.subr.mxu0 %v81
    %818 = vmatpush1.msra.mxu0 %v80
    %819 = vmatprep.subr.mxu0 %v84
    %820 = vmatpush1.msra.mxu0 %v83
    %821 = vmatprep.subr.mxu0 %v87
    %822 = vmatpush1.msra.mxu0 %v86
    %823 = vmatprep.subr.mxu0 %v90
    %824 = vmatpush1.msra.mxu0 %v89
    %825 = vmatprep.subr.mxu0 %v93
    %826 = vmatpush1.msra.mxu0 %v92
    %827 = vmatprep.subr.mxu0 %v96
    %828 = vmatpush1.msra.mxu0 %v95
    %829 = vmatprep.subr.mxu0 0.0
    %830 = vmatpush1.msra.mxu0 0.0
    %831 = vmatprep.subr.mxu0 0.0
    %832 = vmatpush1.msra.mxu0 0.0
    %833 = vmatprep.subr.mxu0 0.0
    %834 = vmatpush1.msra.mxu0 0.0
    %835 = vmatprep.subr.mxu0 0.0
    %836 = vmatpush1.msra.mxu0 0.0
    %837 = vmatprep.subr.mxu0 0.0
    %838 = vmatpush1.msra.mxu0 0.0
    %839 = vmatprep.subr.mxu0 0.0
    %840 = vmatpush1.msra.mxu0 0.0
    %841 = vmatprep.subr.mxu0 0.0
    %842 = vmatpush1.msra.mxu0 0.0
    %843 = vmatprep.subr.mxu0 0.0
    %844 = vmatpush1.msra.mxu0 0.0
    %845 = vmatprep.subr.mxu0 0.0
    %846 = vmatpush1.msra.mxu0 0.0
    %847 = vmatprep.subr.mxu0 0.0
    %848 = vmatpush1.msra.mxu0 0.0
    %849 = vmatprep.subr.mxu0 0.0
    %850 = vmatpush1.msra.mxu0 0.0
    %851 = vmatprep.subr.mxu0 0.0
    %852 = vmatpush1.msra.mxu0 0.0
    %853 = vmatprep.subr.mxu0 0.0
    %854 = vmatpush1.msra.mxu0 0.0
    %855 = vmatprep.subr.mxu0 0.0
    %856 = vmatpush1.msra.mxu0 0.0
    %857 = vmatprep.subr.mxu0 0.0
    %858 = vmatpush1.msra.mxu0 0.0
    %859 = vmatprep.subr.mxu0 0.0
    %860 = vmatpush1.msra.mxu0 0.0
    %861 = vmatprep.mubr.f32.mxu0 0.0
    %862 = vmatmul.mubr.f32.gmra.mrb[0].mxu0 %v793
    %v863 = vpop.f32.mrb[0].mxu0
    %v864 = vadd.f32 %v105, %v863
    %v865 = vpop.f32.mrb[0].mxu0
    %v866 = vadd.f32 %v109, %v865
    %867 = vdwg.mxu0
    %868 = vmatprep.subr.mxu0 0.0
    %869 = vmatpush1.msra.mxu0 %v52
    %870 = vmatprep.subr.mxu0 0.0
    %871 = vmatpush1.msra.mxu0 %v55
    %872 = vmatprep.subr.mxu0 0.0
    %873 = vmatpush1.msra.mxu0 %v58
    %874 = vmatprep.subr.mxu0 0.0
    %875 = vmatpush1.msra.mxu0 %v61
    %876 = vmatprep.subr.mxu0 0.0
    %877 = vmatpush1.msra.mxu0 %v64
    %878 = vmatprep.subr.mxu0 0.0
    %879 = vmatpush1.msra.mxu0 %v67
    %880 = vmatprep.subr.mxu0 0.0
    %881 = vmatpush1.msra.mxu0 %v70
    %882 = vmatprep.subr.mxu0 0.0
    %883 = vmatpush1.msra.mxu0 %v73
    %884 = vmatprep.subr.mxu0 0.0
    %885 = vmatpush1.msra.mxu0 %v76
    %886 = vmatprep.subr.mxu0 0.0
    %887 = vmatpush1.msra.mxu0 %v79
    %888 = vmatprep.subr.mxu0 0.0
    %889 = vmatpush1.msra.mxu0 %v82
    %890 = vmatprep.subr.mxu0 0.0
    %891 = vmatpush1.msra.mxu0 %v85
    %892 = vmatprep.subr.mxu0 0.0
    %893 = vmatpush1.msra.mxu0 %v88
    %894 = vmatprep.subr.mxu0 0.0
    %895 = vmatpush1.msra.mxu0 %v91
    %896 = vmatprep.subr.mxu0 0.0
    %897 = vmatpush1.msra.mxu0 %v94
    %898 = vmatprep.subr.mxu0 0.0
    %899 = vmatpush1.msra.mxu0 %v97
    %900 = vmatprep.subr.mxu0 0.0
    %901 = vmatpush1.msra.mxu0 0.0
    %902 = vmatprep.subr.mxu0 0.0
    %903 = vmatpush1.msra.mxu0 0.0
    %904 = vmatprep.subr.mxu0 0.0
    %905 = vmatpush1.msra.mxu0 0.0
    %906 = vmatprep.subr.mxu0 0.0
    %907 = vmatpush1.msra.mxu0 0.0
    %908 = vmatprep.subr.mxu0 0.0
    %909 = vmatpush1.msra.mxu0 0.0
    %910 = vmatprep.subr.mxu0 0.0
    %911 = vmatpush1.msra.mxu0 0.0
    %912 = vmatprep.subr.mxu0 0.0
    %913 = vmatpush1.msra.mxu0 0.0
    %914 = vmatprep.subr.mxu0 0.0
    %915 = vmatpush1.msra.mxu0 0.0
    %916 = vmatprep.subr.mxu0 0.0
    %917 = vmatpush1.msra.mxu0 0.0
    %918 = vmatprep.subr.mxu0 0.0
    %919 = vmatpush1.msra.mxu0 0.0
    %920 = vmatprep.subr.mxu0 0.0
    %921 = vmatpush1.msra.mxu0 0.0
    %922 = vmatprep.subr.mxu0 0.0
    %923 = vmatpush1.msra.mxu0 0.0
    %924 = vmatprep.subr.mxu0 0.0
    %925 = vmatpush1.msra.mxu0 0.0
    %926 = vmatprep.subr.mxu0 0.0
    %927 = vmatpush1.msra.mxu0 0.0
    %928 = vmatprep.subr.mxu0 0.0
    %929 = vmatpush1.msra.mxu0 0.0
    %930 = vmatprep.subr.mxu0 0.0
    %931 = vmatpush1.msra.mxu0 0.0
    %932 = vmatprep.mubr.f32.mxu0 0.0
    %933 = vmatmul.mubr.f32.gmra.mrb[0].mxu0 %v793
    %v934 = vpop.f32.mrb[0].mxu0
    %v935 = vadd.f32 %v113, %v934
    %v936 = vpop.f32.mrb[0].mxu0
    %937 = vdwg.mxu0
    %v938 = vadd.f32 %v796, %v864
    %v939 = vxor.u32 %v938, 2147483648
    %v940 = vmul.f32 %v939, 1.442695
    %v941 = vpow.pop %v940
    %v942 = vadd.f32 %v941, 1.0
    %v943 = vrcp.pop %v942
    %v944 = vmul.f32 1.0, %v943
    %v946 = vrot.slane %v796, 1
    %v948 = vadd.f32 %v946, %v866
    %v949 = vxor.u32 %v948, 2147483648
    %v950 = vmul.f32 %v949, 1.442695
    %v951 = vpow.pop %v950
    %v952 = vadd.f32 %v951, 1.0
    %v953 = vrcp.pop %v952
    %v954 = vmul.f32 1.0, %v953
    %v955 = vmul.f32 %v944, %v935
    %v956 = vrot.slane %v796, 2
    %v958 = vadd.f32 %v956, %v955
    %v959 = vtanh.pop %v958
    %v960 = vsub.f32 1.0, %v954
    %v961 = vmul.f32 %v960, %v959
    %v962 = vmul.f32 %v954, %v793
    %v963 = vadd.f32 %v961, %v962
    %964 = vst [vmem:[#allocation8 + $0x4] sm:$0x1] %v963
    %s965 = scalar_lea.vmem [#allocation3], 5
    %v966 = vld [vmem:[%s965] ss:$8 sm:$0x7]
    %967 = vmatprep.subr.mxu0 %v51
    %968 = vmatpush1.msra.mxu0 %v50
    %969 = vmatprep.subr.mxu0 %v54
    %970 = vmatpush1.msra.mxu0 %v53
    %971 = vmatprep.subr.mxu0 %v57
    %972 = vmatpush1.msra.mxu0 %v56
    %973 = vmatprep.subr.mxu0 %v60
    %974 = vmatpush1.msra.mxu0 %v59
    %975 = vmatprep.subr.mxu0 %v63
    %976 = vmatpush1.msra.mxu0 %v62
    %977 = vmatprep.subr.mxu0 %v66
    %978 = vmatpush1.msra.mxu0 %v65
    %979 = vmatprep.subr.mxu0 %v69
    %980 = vmatpush1.msra.mxu0 %v68
    %981 = vmatprep.subr.mxu0 %v72
    %982 = vmatpush1.msra.mxu0 %v71
    %983 = vmatprep.subr.mxu0 %v75
    %984 = vmatpush1.msra.mxu0 %v74
    %985 = vmatprep.subr.mxu0 %v78
    %986 = vmatpush1.msra.mxu0 %v77
    %987 = vmatprep.subr.mxu0 %v81
    %988 = vmatpush1.msra.mxu0 %v80
    %989 = vmatprep.subr.mxu0 %v84
    %990 = vmatpush1.msra.mxu0 %v83
    %991 = vmatprep.subr.mxu0 %v87
    %992 = vmatpush1.msra.mxu0 %v86
    %993 = vmatprep.subr.mxu0 %v90
    %994 = vmatpush1.msra.mxu0 %v89
    %995 = vmatprep.subr.mxu0 %v93
    %996 = vmatpush1.msra.mxu0 %v92
    %997 = vmatprep.subr.mxu0 %v96
    %998 = vmatpush1.msra.mxu0 %v95
    %999 = vmatprep.subr.mxu0 0.0
    %1000 = vmatpush1.msra.mxu0 0.0
    %1001 = vmatprep.subr.mxu0 0.0
    %1002 = vmatpush1.msra.mxu0 0.0
    %1003 = vmatprep.subr.mxu0 0.0
    %1004 = vmatpush1.msra.mxu0 0.0
    %1005 = vmatprep.subr.mxu0 0.0
    %1006 = vmatpush1.msra.mxu0 0.0
    %1007 = vmatprep.subr.mxu0 0.0
    %1008 = vmatpush1.msra.mxu0 0.0
    %1009 = vmatprep.subr.mxu0 0.0
    %1010 = vmatpush1.msra.mxu0 0.0
    %1011 = vmatprep.subr.mxu0 0.0
    %1012 = vmatpush1.msra.mxu0 0.0
    %1013 = vmatprep.subr.mxu0 0.0
    %1014 = vmatpush1.msra.mxu0 0.0
    %1015 = vmatprep.subr.mxu0 0.0
    %1016 = vmatpush1.msra.mxu0 0.0
    %1017 = vmatprep.subr.mxu0 0.0
    %1018 = vmatpush1.msra.mxu0 0.0
    %1019 = vmatprep.subr.mxu0 0.0
    %1020 = vmatpush1.msra.mxu0 0.0
    %1021 = vmatprep.subr.mxu0 0.0
    %1022 = vmatpush1.msra.mxu0 0.0
    %1023 = vmatprep.subr.mxu0 0.0
    %1024 = vmatpush1.msra.mxu0 0.0
    %1025 = vmatprep.subr.mxu0 0.0
    %1026 = vmatpush1.msra.mxu0 0.0
    %1027 = vmatprep.subr.mxu0 0.0
    %1028 = vmatpush1.msra.mxu0 0.0
    %1029 = vmatprep.subr.mxu0 0.0
    %1030 = vmatpush1.msra.mxu0 0.0
    %1031 = vmatprep.mubr.f32.mxu0 0.0
    %1032 = vmatmul.mubr.f32.gmra.mrb[0].mxu0 %v963
    %v1033 = vpop.f32.mrb[0].mxu0
    %v1034 = vadd.f32 %v105, %v1033
    %v1035 = vpop.f32.mrb[0].mxu0
    %v1036 = vadd.f32 %v109, %v1035
    %1037 = vdwg.mxu0
    %1038 = vmatprep.subr.mxu0 0.0
    %1039 = vmatpush1.msra.mxu0 %v52
    %1040 = vmatprep.subr.mxu0 0.0
    %1041 = vmatpush1.msra.mxu0 %v55
    %1042 = vmatprep.subr.mxu0 0.0
    %1043 = vmatpush1.msra.mxu0 %v58
    %1044 = vmatprep.subr.mxu0 0.0
    %1045 = vmatpush1.msra.mxu0 %v61
    %1046 = vmatprep.subr.mxu0 0.0
    %1047 = vmatpush1.msra.mxu0 %v64
    %1048 = vmatprep.subr.mxu0 0.0
    %1049 = vmatpush1.msra.mxu0 %v67
    %1050 = vmatprep.subr.mxu0 0.0
    %1051 = vmatpush1.msra.mxu0 %v70
    %1052 = vmatprep.subr.mxu0 0.0
    %1053 = vmatpush1.msra.mxu0 %v73
    %1054 = vmatprep.subr.mxu0 0.0
    %1055 = vmatpush1.msra.mxu0 %v76
    %1056 = vmatprep.subr.mxu0 0.0
    %1057 = vmatpush1.msra.mxu0 %v79
    %1058 = vmatprep.subr.mxu0 0.0
    %1059 = vmatpush1.msra.mxu0 %v82
    %1060 = vmatprep.subr.mxu0 0.0
    %1061 = vmatpush1.msra.mxu0 %v85
    %1062 = vmatprep.subr.mxu0 0.0
    %1063 = vmatpush1.msra.mxu0 %v88
    %1064 = vmatprep.subr.mxu0 0.0
    %1065 = vmatpush1.msra.mxu0 %v91
    %1066 = vmatprep.subr.mxu0 0.0
    %1067 = vmatpush1.msra.mxu0 %v94
    %1068 = vmatprep.subr.mxu0 0.0
    %1069 = vmatpush1.msra.mxu0 %v97
    %1070 = vmatprep.subr.mxu0 0.0
    %1071 = vmatpush1.msra.mxu0 0.0
    %1072 = vmatprep.subr.mxu0 0.0
    %1073 = vmatpush1.msra.mxu0 0.0
    %1074 = vmatprep.subr.mxu0 0.0
    %1075 = vmatpush1.msra.mxu0 0.0
    %1076 = vmatprep.subr.mxu0 0.0
    %1077 = vmatpush1.msra.mxu0 0.0
    %1078 = vmatprep.subr.mxu0 0.0
    %1079 = vmatpush1.msra.mxu0 0.0
    %1080 = vmatprep.subr.mxu0 0.0
    %1081 = vmatpush1.msra.mxu0 0.0
    %1082 = vmatprep.subr.mxu0 0.0
    %1083 = vmatpush1.msra.mxu0 0.0
    %1084 = vmatprep.subr.mxu0 0.0
    %1085 = vmatpush1.msra.mxu0 0.0
    %1086 = vmatprep.subr.mxu0 0.0
    %1087 = vmatpush1.msra.mxu0 0.0
    %1088 = vmatprep.subr.mxu0 0.0
    %1089 = vmatpush1.msra.mxu0 0.0
    %1090 = vmatprep.subr.mxu0 0.0
    %1091 = vmatpush1.msra.mxu0 0.0
    %1092 = vmatprep.subr.mxu0 0.0
    %1093 = vmatpush1.msra.mxu0 0.0
    %1094 = vmatprep.subr.mxu0 0.0
    %1095 = vmatpush1.msra.mxu0 0.0
    %1096 = vmatprep.subr.mxu0 0.0
    %1097 = vmatpush1.msra.mxu0 0.0
    %1098 = vmatprep.subr.mxu0 0.0
    %1099 = vmatpush1.msra.mxu0 0.0
    %1100 = vmatprep.subr.mxu0 0.0
    %1101 = vmatpush1.msra.mxu0 0.0
    %1102 = vmatprep.mubr.f32.mxu0 0.0
    %1103 = vmatmul.mubr.f32.gmra.mrb[0].mxu0 %v963
    %v1104 = vpop.f32.mrb[0].mxu0
    %v1105 = vadd.f32 %v113, %v1104
    %v1106 = vpop.f32.mrb[0].mxu0
    %1107 = vdwg.mxu0
    %v1108 = vadd.f32 %v966, %v1034
    %v1109 = vxor.u32 %v1108, 2147483648
    %v1110 = vmul.f32 %v1109, 1.442695
    %v1111 = vpow.pop %v1110
    %v1112 = vadd.f32 %v1111, 1.0
    %v1113 = vrcp.pop %v1112
    %v1114 = vmul.f32 1.0, %v1113
    %v1116 = vrot.slane %v966, 1
    %v1118 = vadd.f32 %v1116, %v1036
    %v1119 = vxor.u32 %v1118, 2147483648
    %v1120 = vmul.f32 %v1119, 1.442695
    %v1121 = vpow.pop %v1120
    %v1122 = vadd.f32 %v1121, 1.0
    %v1123 = vrcp.pop %v1122
    %v1124 = vmul.f32 1.0, %v1123
    %v1125 = vmul.f32 %v1114, %v1105
    %v1126 = vrot.slane %v966, 2
    %v1128 = vadd.f32 %v1126, %v1125
    %v1129 = vtanh.pop %v1128
    %v1130 = vsub.f32 1.0, %v1124
    %v1131 = vmul.f32 %v1130, %v1129
    %v1132 = vmul.f32 %v1124, %v963
    %v1133 = vadd.f32 %v1131, %v1132
    %1134 = vst [vmem:[#allocation8 + $0x5] sm:$0x1] %v1133
    %s1135 = scalar_lea.vmem [#allocation3], 6
    %v1136 = vld [vmem:[%s1135] ss:$8 sm:$0x7]
    %1137 = vmatprep.subr.mxu0 %v51
    %1138 = vmatpush1.msra.mxu0 %v50
    %1139 = vmatprep.subr.mxu0 %v54
    %1140 = vmatpush1.msra.mxu0 %v53
    %1141 = vmatprep.subr.mxu0 %v57
    %1142 = vmatpush1.msra.mxu0 %v56
    %1143 = vmatprep.subr.mxu0 %v60
    %1144 = vmatpush1.msra.mxu0 %v59
    %1145 = vmatprep.subr.mxu0 %v63
    %1146 = vmatpush1.msra.mxu0 %v62
    %1147 = vmatprep.subr.mxu0 %v66
    %1148 = vmatpush1.msra.mxu0 %v65
    %1149 = vmatprep.subr.mxu0 %v69
    %1150 = vmatpush1.msra.mxu0 %v68
    %1151 = vmatprep.subr.mxu0 %v72
    %1152 = vmatpush1.msra.mxu0 %v71
    %1153 = vmatprep.subr.mxu0 %v75
    %1154 = vmatpush1.msra.mxu0 %v74
    %1155 = vmatprep.subr.mxu0 %v78
    %1156 = vmatpush1.msra.mxu0 %v77
    %1157 = vmatprep.subr.mxu0 %v81
    %1158 = vmatpush1.msra.mxu0 %v80
    %1159 = vmatprep.subr.mxu0 %v84
    %1160 = vmatpush1.msra.mxu0 %v83
    %1161 = vmatprep.subr.mxu0 %v87
    %1162 = vmatpush1.msra.mxu0 %v86
    %1163 = vmatprep.subr.mxu0 %v90
    %1164 = vmatpush1.msra.mxu0 %v89
    %1165 = vmatprep.subr.mxu0 %v93
    %1166 = vmatpush1.msra.mxu0 %v92
    %1167 = vmatprep.subr.mxu0 %v96
    %1168 = vmatpush1.msra.mxu0 %v95
    %1169 = vmatprep.subr.mxu0 0.0
    %1170 = vmatpush1.msra.mxu0 0.0
    %1171 = vmatprep.subr.mxu0 0.0
    %1172 = vmatpush1.msra.mxu0 0.0
    %1173 = vmatprep.subr.mxu0 0.0
    %1174 = vmatpush1.msra.mxu0 0.0
    %1175 = vmatprep.subr.mxu0 0.0
    %1176 = vmatpush1.msra.mxu0 0.0
    %1177 = vmatprep.subr.mxu0 0.0
    %1178 = vmatpush1.msra.mxu0 0.0
    %1179 = vmatprep.subr.mxu0 0.0
    %1180 = vmatpush1.msra.mxu0 0.0
    %1181 = vmatprep.subr.mxu0 0.0
    %1182 = vmatpush1.msra.mxu0 0.0
    %1183 = vmatprep.subr.mxu0 0.0
    %1184 = vmatpush1.msra.mxu0 0.0
    %1185 = vmatprep.subr.mxu0 0.0
    %1186 = vmatpush1.msra.mxu0 0.0
    %1187 = vmatprep.subr.mxu0 0.0
    %1188 = vmatpush1.msra.mxu0 0.0
    %1189 = vmatprep.subr.mxu0 0.0
    %1190 = vmatpush1.msra.mxu0 0.0
    %1191 = vmatprep.subr.mxu0 0.0
    %1192 = vmatpush1.msra.mxu0 0.0
    %1193 = vmatprep.subr.mxu0 0.0
    %1194 = vmatpush1.msra.mxu0 0.0
    %1195 = vmatprep.subr.mxu0 0.0
    %1196 = vmatpush1.msra.mxu0 0.0
    %1197 = vmatprep.subr.mxu0 0.0
    %1198 = vmatpush1.msra.mxu0 0.0
    %1199 = vmatprep.subr.mxu0 0.0
    %1200 = vmatpush1.msra.mxu0 0.0
    %1201 = vmatprep.mubr.f32.mxu0 0.0
    %1202 = vmatmul.mubr.f32.gmra.mrb[0].mxu0 %v1133
    %v1203 = vpop.f32.mrb[0].mxu0
    %v1204 = vadd.f32 %v105, %v1203
    %v1205 = vpop.f32.mrb[0].mxu0
    %v1206 = vadd.f32 %v109, %v1205
    %1207 = vdwg.mxu0
    %1208 = vmatprep.subr.mxu0 0.0
    %1209 = vmatpush1.msra.mxu0 %v52
    %1210 = vmatprep.subr.mxu0 0.0
    %1211 = vmatpush1.msra.mxu0 %v55
    %1212 = vmatprep.subr.mxu0 0.0
    %1213 = vmatpush1.msra.mxu0 %v58
    %1214 = vmatprep.subr.mxu0 0.0
    %1215 = vmatpush1.msra.mxu0 %v61
    %1216 = vmatprep.subr.mxu0 0.0
    %1217 = vmatpush1.msra.mxu0 %v64
    %1218 = vmatprep.subr.mxu0 0.0
    %1219 = vmatpush1.msra.mxu0 %v67
    %1220 = vmatprep.subr.mxu0 0.0
    %1221 = vmatpush1.msra.mxu0 %v70
    %1222 = vmatprep.subr.mxu0 0.0
    %1223 = vmatpush1.msra.mxu0 %v73
    %1224 = vmatprep.subr.mxu0 0.0
    %1225 = vmatpush1.msra.mxu0 %v76
    %1226 = vmatprep.subr.mxu0 0.0
    %1227 = vmatpush1.msra.mxu0 %v79
    %1228 = vmatprep.subr.mxu0 0.0
    %1229 = vmatpush1.msra.mxu0 %v82
    %1230 = vmatprep.subr.mxu0 0.0
    %1231 = vmatpush1.msra.mxu0 %v85
    %1232 = vmatprep.subr.mxu0 0.0
    %1233 = vmatpush1.msra.mxu0 %v88
    %1234 = vmatprep.subr.mxu0 0.0
    %1235 = vmatpush1.msra.mxu0 %v91
    %1236 = vmatprep.subr.mxu0 0.0
    %1237 = vmatpush1.msra.mxu0 %v94
    %1238 = vmatprep.subr.mxu0 0.0
    %1239 = vmatpush1.msra.mxu0 %v97
    %1240 = vmatprep.subr.mxu0 0.0
    %1241 = vmatpush1.msra.mxu0 0.0
    %1242 = vmatprep.subr.mxu0 0.0
    %1243 = vmatpush1.msra.mxu0 0.0
    %1244 = vmatprep.subr.mxu0 0.0
    %1245 = vmatpush1.msra.mxu0 0.0
    %1246 = vmatprep.subr.mxu0 0.0
    %1247 = vmatpush1.msra.mxu0 0.0
    %1248 = vmatprep.subr.mxu0 0.0
    %1249 = vmatpush1.msra.mxu0 0.0
    %1250 = vmatprep.subr.mxu0 0.0
    %1251 = vmatpush1.msra.mxu0 0.0
    %1252 = vmatprep.subr.mxu0 0.0
    %1253 = vmatpush1.msra.mxu0 0.0
    %1254 = vmatprep.subr.mxu0 0.0
    %1255 = vmatpush1.msra.mxu0 0.0
    %1256 = vmatprep.subr.mxu0 0.0
    %1257 = vmatpush1.msra.mxu0 0.0
    %1258 = vmatprep.subr.mxu0 0.0
    %1259 = vmatpush1.msra.mxu0 0.0
    %1260 = vmatprep.subr.mxu0 0.0
    %1261 = vmatpush1.msra.mxu0 0.0
    %1262 = vmatprep.subr.mxu0 0.0
    %1263 = vmatpush1.msra.mxu0 0.0
    %1264 = vmatprep.subr.mxu0 0.0
    %1265 = vmatpush1.msra.mxu0 0.0
    %1266 = vmatprep.subr.mxu0 0.0
    %1267 = vmatpush1.msra.mxu0 0.0
    %1268 = vmatprep.subr.mxu0 0.0
    %1269 = vmatpush1.msra.mxu0 0.0
    %1270 = vmatprep.subr.mxu0 0.0
    %1271 = vmatpush1.msra.mxu0 0.0
    %1272 = vmatprep.mubr.f32.mxu0 0.0
    %1273 = vmatmul.mubr.f32.gmra.mrb[0].mxu0 %v1133
    %v1274 = vpop.f32.mrb[0].mxu0
    %v1275 = vadd.f32 %v113, %v1274
    %v1276 = vpop.f32.mrb[0].mxu0
    %1277 = vdwg.mxu0
    %v1278 = vadd.f32 %v1136, %v1204
    %v1279 = vxor.u32 %v1278, 2147483648
    %v1280 = vmul.f32 %v1279, 1.442695
    %v1281 = vpow.pop %v1280
    %v1282 = vadd.f32 %v1281, 1.0
    %v1283 = vrcp.pop %v1282
    %v1284 = vmul.f32 1.0, %v1283
    %v1286 = vrot.slane %v1136, 1
    %v1288 = vadd.f32 %v1286, %v1206
    %v1289 = vxor.u32 %v1288, 2147483648
    %v1290 = vmul.f32 %v1289, 1.442695
    %v1291 = vpow.pop %v1290
    %v1292 = vadd.f32 %v1291, 1.0
    %v1293 = vrcp.pop %v1292
    %v1294 = vmul.f32 1.0, %v1293
    %v1295 = vmul.f32 %v1284, %v1275
    %v1296 = vrot.slane %v1136, 2
    %v1298 = vadd.f32 %v1296, %v1295
    %v1299 = vtanh.pop %v1298
    %v1300 = vsub.f32 1.0, %v1294
    %v1301 = vmul.f32 %v1300, %v1299
    %v1302 = vmul.f32 %v1294, %v1133
    %v1303 = vadd.f32 %v1301, %v1302
    %1304 = vst [vmem:[#allocation8 + $0x6] sm:$0x1] %v1303
    %s1305 = scalar_lea.vmem [#allocation3], 7
    %v1306 = vld [vmem:[%s1305] ss:$8 sm:$0x7]
    %1307 = vmatprep.subr.mxu0 %v51
    %1308 = vmatpush1.msra.mxu0 %v50
    %1309 = vmatprep.subr.mxu0 %v54
    %1310 = vmatpush1.msra.mxu0 %v53
    %1311 = vmatprep.subr.mxu0 %v57
    %1312 = vmatpush1.msra.mxu0 %v56
    %1313 = vmatprep.subr.mxu0 %v60
    %1314 = vmatpush1.msra.mxu0 %v59
    %1315 = vmatprep.subr.mxu0 %v63
    %1316 = vmatpush1.msra.mxu0 %v62
    %1317 = vmatprep.subr.mxu0 %v66
    %1318 = vmatpush1.msra.mxu0 %v65
    %1319 = vmatprep.subr.mxu0 %v69
    %1320 = vmatpush1.msra.mxu0 %v68
    %1321 = vmatprep.subr.mxu0 %v72
    %1322 = vmatpush1.msra.mxu0 %v71
    %1323 = vmatprep.subr.mxu0 %v75
    %1324 = vmatpush1.msra.mxu0 %v74
    %1325 = vmatprep.subr.mxu0 %v78
    %1326 = vmatpush1.msra.mxu0 %v77
    %1327 = vmatprep.subr.mxu0 %v81
    %1328 = vmatpush1.msra.mxu0 %v80
    %1329 = vmatprep.subr.mxu0 %v84
    %1330 = vmatpush1.msra.mxu0 %v83
    %1331 = vmatprep.subr.mxu0 %v87
    %1332 = vmatpush1.msra.mxu0 %v86
    %1333 = vmatprep.subr.mxu0 %v90
    %1334 = vmatpush1.msra.mxu0 %v89
    %1335 = vmatprep.subr.mxu0 %v93
    %1336 = vmatpush1.msra.mxu0 %v92
    %1337 = vmatprep.subr.mxu0 %v96
    %1338 = vmatpush1.msra.mxu0 %v95
    %1339 = vmatprep.subr.mxu0 0.0
    %1340 = vmatpush1.msra.mxu0 0.0
    %1341 = vmatprep.subr.mxu0 0.0
    %1342 = vmatpush1.msra.mxu0 0.0
    %1343 = vmatprep.subr.mxu0 0.0
    %1344 = vmatpush1.msra.mxu0 0.0
    %1345 = vmatprep.subr.mxu0 0.0
    %1346 = vmatpush1.msra.mxu0 0.0
    %1347 = vmatprep.subr.mxu0 0.0
    %1348 = vmatpush1.msra.mxu0 0.0
    %1349 = vmatprep.subr.mxu0 0.0
    %1350 = vmatpush1.msra.mxu0 0.0
    %1351 = vmatprep.subr.mxu0 0.0
    %1352 = vmatpush1.msra.mxu0 0.0
    %1353 = vmatprep.subr.mxu0 0.0
    %1354 = vmatpush1.msra.mxu0 0.0
    %1355 = vmatprep.subr.mxu0 0.0
    %1356 = vmatpush1.msra.mxu0 0.0
    %1357 = vmatprep.subr.mxu0 0.0
    %1358 = vmatpush1.msra.mxu0 0.0
    %1359 = vmatprep.subr.mxu0 0.0
    %1360 = vmatpush1.msra.mxu0 0.0
    %1361 = vmatprep.subr.mxu0 0.0
    %1362 = vmatpush1.msra.mxu0 0.0
    %1363 = vmatprep.subr.mxu0 0.0
    %1364 = vmatpush1.msra.mxu0 0.0
    %1365 = vmatprep.subr.mxu0 0.0
    %1366 = vmatpush1.msra.mxu0 0.0
    %1367 = vmatprep.subr.mxu0 0.0
    %1368 = vmatpush1.msra.mxu0 0.0
    %1369 = vmatprep.subr.mxu0 0.0
    %1370 = vmatpush1.msra.mxu0 0.0
    %1371 = vmatprep.mubr.f32.mxu0 0.0
    %1372 = vmatmul.mubr.f32.gmra.mrb[0].mxu0 %v1303
    %v1373 = vpop.f32.mrb[0].mxu0
    %v1374 = vadd.f32 %v105, %v1373
    %v1375 = vpop.f32.mrb[0].mxu0
    %v1376 = vadd.f32 %v109, %v1375
    %1377 = vdwg.mxu0
    %1378 = vmatprep.subr.mxu0 0.0
    %1379 = vmatpush1.msra.mxu0 %v52
    %1380 = vmatprep.subr.mxu0 0.0
    %1381 = vmatpush1.msra.mxu0 %v55
    %1382 = vmatprep.subr.mxu0 0.0
    %1383 = vmatpush1.msra.mxu0 %v58
    %1384 = vmatprep.subr.mxu0 0.0
    %1385 = vmatpush1.msra.mxu0 %v61
    %1386 = vmatprep.subr.mxu0 0.0
    %1387 = vmatpush1.msra.mxu0 %v64
    %1388 = vmatprep.subr.mxu0 0.0
    %1389 = vmatpush1.msra.mxu0 %v67
    %1390 = vmatprep.subr.mxu0 0.0
    %1391 = vmatpush1.msra.mxu0 %v70
    %1392 = vmatprep.subr.mxu0 0.0
    %1393 = vmatpush1.msra.mxu0 %v73
    %1394 = vmatprep.subr.mxu0 0.0
    %1395 = vmatpush1.msra.mxu0 %v76
    %1396 = vmatprep.subr.mxu0 0.0
    %1397 = vmatpush1.msra.mxu0 %v79
    %1398 = vmatprep.subr.mxu0 0.0
    %1399 = vmatpush1.msra.mxu0 %v82
    %1400 = vmatprep.subr.mxu0 0.0
    %1401 = vmatpush1.msra.mxu0 %v85
    %1402 = vmatprep.subr.mxu0 0.0
    %1403 = vmatpush1.msra.mxu0 %v88
    %1404 = vmatprep.subr.mxu0 0.0
    %1405 = vmatpush1.msra.mxu0 %v91
    %1406 = vmatprep.subr.mxu0 0.0
    %1407 = vmatpush1.msra.mxu0 %v94
    %1408 = vmatprep.subr.mxu0 0.0
    %1409 = vmatpush1.msra.mxu0 %v97
    %1410 = vmatprep.subr.mxu0 0.0
    %1411 = vmatpush1.msra.mxu0 0.0
    %1412 = vmatprep.subr.mxu0 0.0
    %1413 = vmatpush1.msra.mxu0 0.0
    %1414 = vmatprep.subr.mxu0 0.0
    %1415 = vmatpush1.msra.mxu0 0.0
    %1416 = vmatprep.subr.mxu0 0.0
    %1417 = vmatpush1.msra.mxu0 0.0
    %1418 = vmatprep.subr.mxu0 0.0
    %1419 = vmatpush1.msra.mxu0 0.0
    %1420 = vmatprep.subr.mxu0 0.0
    %1421 = vmatpush1.msra.mxu0 0.0
    %1422 = vmatprep.subr.mxu0 0.0
    %1423 = vmatpush1.msra.mxu0 0.0
    %1424 = vmatprep.subr.mxu0 0.0
    %1425 = vmatpush1.msra.mxu0 0.0
    %1426 = vmatprep.subr.mxu0 0.0
    %1427 = vmatpush1.msra.mxu0 0.0
    %1428 = vmatprep.subr.mxu0 0.0
    %1429 = vmatpush1.msra.mxu0 0.0
    %1430 = vmatprep.subr.mxu0 0.0
    %1431 = vmatpush1.msra.mxu0 0.0
    %1432 = vmatprep.subr.mxu0 0.0
    %1433 = vmatpush1.msra.mxu0 0.0
    %1434 = vmatprep.subr.mxu0 0.0
    %1435 = vmatpush1.msra.mxu0 0.0
    %1436 = vmatprep.subr.mxu0 0.0
    %1437 = vmatpush1.msra.mxu0 0.0
    %1438 = vmatprep.subr.mxu0 0.0
    %1439 = vmatpush1.msra.mxu0 0.0
    %1440 = vmatprep.subr.mxu0 0.0
    %1441 = vmatpush1.msra.mxu0 0.0
    %1442 = vmatprep.mubr.f32.mxu0 0.0
    %1443 = vmatmul.mubr.f32.gmra.mrb[0].mxu0 %v1303
    %v1444 = vpop.f32.mrb[0].mxu0
    %v1445 = vadd.f32 %v113, %v1444
    %v1446 = vpop.f32.mrb[0].mxu0
    %1447 = vdwg.mxu0
    %v1448 = vadd.f32 %v1306, %v1374
    %v1449 = vxor.u32 %v1448, 2147483648
    %v1450 = vmul.f32 %v1449, 1.442695
    %v1451 = vpow.pop %v1450
    %v1452 = vadd.f32 %v1451, 1.0
    %v1453 = vrcp.pop %v1452
    %v1454 = vmul.f32 1.0, %v1453
    %v1456 = vrot.slane %v1306, 1
    %v1458 = vadd.f32 %v1456, %v1376
    %v1459 = vxor.u32 %v1458, 2147483648
    %v1460 = vmul.f32 %v1459, 1.442695
    %v1461 = vpow.pop %v1460
    %v1462 = vadd.f32 %v1461, 1.0
    %v1463 = vrcp.pop %v1462
    %v1464 = vmul.f32 1.0, %v1463
    %v1465 = vmul.f32 %v1454, %v1445
    %v1466 = vrot.slane %v1306, 2
    %v1468 = vadd.f32 %v1466, %v1465
    %v1469 = vtanh.pop %v1468
    %v1470 = vsub.f32 1.0, %v1464
    %v1471 = vmul.f32 %v1470, %v1469
    %v1472 = vmul.f32 %v1464, %v1303
    %v1473 = vadd.f32 %v1471, %v1472
    %1474 = vst [vmem:[#allocation8 + $0x7] sm:$0x1] %v1473
    %1475 = vst [vmem:[#allocation2] sm:$0x1] %v1473
    // Predicated region
    $region30: #{tpu_custom_call.1} parent=1 // pred_check
      _
    $region31: #{tpu_custom_call.1} parent=1 // pred_check_branch
      %1477 = sbr.rel (0) target = $region33
    $region32: #{tpu_custom_call.1} parent=1 // pred_region
      %s1479 = ssub.s32 128, 128
      %1480 = vsyncadd [#allocation5], %s1479
      %s1482 = sshll.u32 [#allocation8], 4
      %s1483 = int_to_ptr.vmem [resolvable:$true] %s1482
      %1485 = dma.vmem_to_hbm [thread:$0]  %s1483, 128, %s4, [#allocation5]
    $region33: #{tpu_custom_call.1} parent=1 // pred_fallthru
      _
    // Predicated region
    $region34: #{tpu_custom_call.1} parent=1 // pred_check
      _
    $region35: #{tpu_custom_call.1} parent=1 // pred_check_branch
      %1487 = sbr.rel (0) target = $region37
    $region36: #{tpu_custom_call.1} parent=1 // pred_region
      %1488 = dma.done [#allocation5], 128
    $region37: #{tpu_custom_call.1} parent=1 // pred_fallthru
      _
    %1489 = vsyncpa [#allocation4], 1
    %1490 = vsyncpa [#allocation7], 1
    %1491 = vsyncpa [#allocation5], 1

</llo_original>
